<compile_context>
chip_gen: v7x
topology: tpu7x:2x2x1
jax: 0.10.0
libtpu: 0.0.40
codegen_flags: <defaults>
</compile_context>

<pallas_src>
import functools

import jax
import jax.numpy as jnp
from jax import lax
from jax.experimental import pallas as pl
from jax.experimental.pallas import tpu as pltpu


def _round_up(n, m):
    return ((n + m - 1) // m) * m


# ----------------------------------------------------------------------------
# Pallas kernel
# ----------------------------------------------------------------------------
def gru_linear_kernel(
    x_ref,       # (S*B, E)   time-major inputs, flattened (row = t*B + b), MXU dtype
    w_i_ref,     # (E, GP)    packed input weights  [W_ir | W_iz | W_in | 0], MXU dtype
    w_h_ref,     # (H, GP)    packed hidden weights [W_hr | W_hz | W_hn | 0], MXU dtype
    b_i_ref,     # (1, GP)    fused biases [b_ir+b_hr | b_iz+b_hz | b_in | 0], f32
    b_hn_ref,    # (1, H)     hidden-path n bias (must stay inside the r gate), f32
    w_lin_ref,   # (H, PC)    linear head weight, MXU dtype
    b_lin_ref,   # (1, PC)    f32
    out_ref,     # (B, PC)    f32
    gi_ref,      # (S*B, GP)  VMEM scratch: all input-path projections, f32
    *,
    seq_len,
    batch,
    hidden,
):
    S, B, H = seq_len, batch, hidden

    # ---- Prologue: every input-path projection in one lane-dense MXU matmul.
    # This removes the input-side matmuls from the serial h->h dependency chain.
    gi_ref[...] = (
        jnp.dot(x_ref[...], w_i_ref[...], preferred_element_type=jnp.float32)
        + b_i_ref[...]
    )

    w_h = w_h_ref[...]                                        # loop-invariant weights
    # Broadcast once, outside the recurrence (JAX does not CSE broadcast_in_dim).
    b_hn = jnp.broadcast_to(b_hn_ref[...], (B, H))

    # TODO(synk): keep w_h staged in the MXU across the unrolled recurrence via
    # pltpu.matmul_push_rhs / matmul_acc_lhs / matmul_pop (review item 2); a
    # plain per-step jnp.dot is kept here for robust lowering.
    def step(t, h):
        row = pl.multiple_of(t * B, B)                        # aligned dynamic slice start
        g = gi_ref[pl.ds(row, B), :]                          # (B, GP) f32
        gh = jnp.dot(h.astype(w_h.dtype), w_h,
                     preferred_element_type=jnp.float32)      # (B, GP), one fused matmul
        # Packed gate layout: cols [0:H)=r, [H:2H)=z, [2H:3H)=n, rest = zero pad.
        rz = jax.nn.sigmoid(g[:, 0:2 * H] + gh[:, 0:2 * H])   # one packed sigmoid
        r = rz[:, 0:H]
        z = rz[:, H:2 * H]
        n = jnp.tanh(g[:, 2 * H:3 * H] + r * (gh[:, 2 * H:3 * H] + b_hn))
        return (1.0 - z) * n + z * h                          # (B, H) f32

    h0 = jnp.zeros((B, H), jnp.float32)
    # Full unroll for short S (lets the LLO scheduler overlap EUP/VPU work with
    # MXU across steps); partial unroll for long S to bound code size / spills.
    h_last = lax.fori_loop(0, S, step, h0, unroll=(True if S <= 16 else 8))

    # Linear head on h_T.
    # TODO(synk): if pred_len*c_out grows, pad PC to a multiple of 128 so this
    # final store becomes an unmasked lane-dense vst.
    out_ref[...] = (
        jnp.dot(h_last.astype(w_lin_ref.dtype), w_lin_ref[...],
                preferred_element_type=jnp.float32)
        + b_lin_ref[...]
    )


# ----------------------------------------------------------------------------
# One-time parameter packing (hoisted out of the per-call path).
# ----------------------------------------------------------------------------
def prepare_params(params, *, mxu_dtype=jnp.bfloat16):
    """Pack GRU/Linear parameters once.

    Gate order is PyTorch's (r, z, n).  The hidden-path r/z biases are folded
    into the input-path bias (they appear purely additively before the
    sigmoid); the n-gate hidden bias stays separate since it sits inside the
    r-gated term.  MXU operands are cast to `mxu_dtype` (bf16 by default);
    accumulation and all gate math remain f32 inside the kernel.
    """
    w_ih = jnp.asarray(params["weight_ih_l0"], jnp.float32)    # (3H, E)
    w_hh = jnp.asarray(params["weight_hh_l0"], jnp.float32)    # (3H, H)
    b_ih = jnp.asarray(params["bias_ih_l0"], jnp.float32)      # (3H,)
    b_hh = jnp.asarray(params["bias_hh_l0"], jnp.float32)      # (3H,)
    w_lin = jnp.asarray(params["linear_weight"], jnp.float32)  # (PC, H)
    b_lin = jnp.asarray(params["linear_bias"], jnp.float32)    # (PC,)

    H = w_hh.shape[1]
    PC = w_lin.shape[0]
    GP = _round_up(3 * H, 128)          # packed, lane-dense gate width

    def pad_cols(a):
        return jnp.pad(a, ((0, 0), (0, GP - a.shape[1])))

    # Transposed weights already have columns in gate order r|z|n; just pad.
    w_i = pad_cols(w_ih.T).astype(mxu_dtype)                   # (E, GP)
    w_h = pad_cols(w_hh.T).astype(mxu_dtype)                   # (H, GP)

    b_fused = b_ih + jnp.concatenate([b_hh[:2 * H], jnp.zeros((H,), jnp.float32)])
    b_i = jnp.pad(b_fused, (0, GP - 3 * H)).reshape(1, GP)     # (1, GP) f32
    b_hn = b_hh[2 * H:3 * H].reshape(1, H)                     # (1, H)  f32

    return {
        "w_i": w_i,
        "w_h": w_h,
        "b_i": b_i,
        "b_hn": b_hn,
        "w_lin": w_lin.T.astype(mxu_dtype),                    # (H, PC)
        "b_lin": b_lin.reshape(1, PC),                         # (1, PC) f32
    }


# ----------------------------------------------------------------------------
# Jitted forward: only the x transpose + the pallas_call.
# ----------------------------------------------------------------------------
@functools.partial(jax.jit, static_argnames=("pred_len", "c_out"))
def model_forward(x, packed, *, pred_len, c_out):
    """x: (B, S, E) batch-first, as in the PyTorch module."""
    B, S, E = x.shape
    w_i, w_h = packed["w_i"], packed["w_h"]
    H, GP = w_h.shape
    PC = packed["w_lin"].shape[1]

    # Time-major, flattened: row index = t*B + b, so each step reads a
    # contiguous (B, GP) slab of the precomputed projections.
    x_flat = jnp.transpose(x, (1, 0, 2)).reshape(S * B, E).astype(w_i.dtype)

    vmem = pl.BlockSpec(memory_space=pltpu.MemorySpace.VMEM)
    kernel = functools.partial(gru_linear_kernel, seq_len=S, batch=B, hidden=H)
    # TODO(synk): for B >= ~16 on v7x, add a "parallel" grid axis over batch so
    # both TensorCores run independent batch halves; for large S*B stream the
    # input projection over time (grid axis over S, "arbitrary") or set
    # pltpu.CompilerParams(vmem_limit_bytes=...).  At these shapes everything
    # trivially fits the default scoped VMEM on v5e/v6e/v7x.
    out = pl.pallas_call(
        kernel,
        out_shape=jax.ShapeDtypeStruct((B, PC), jnp.float32),
        in_specs=[vmem] * 7,
        out_specs=vmem,
        scratch_shapes=[pltpu.VMEM((S * B, GP), jnp.float32)],
    )(x_flat, w_i, w_h, packed["b_i"], packed["b_hn"],
      packed["w_lin"], packed["b_lin"])
    return out.reshape(-1, pred_len, c_out)


# ----------------------------------------------------------------------------
# Pure-JAX reference (mirrors torch.nn.GRU + nn.Linear) for validation.
# ----------------------------------------------------------------------------
def reference_forward(x, params, *, pred_len, c_out):
    w_ih = params["weight_ih_l0"]
    w_hh = params["weight_hh_l0"]
    b_ih = params["bias_ih_l0"]
    b_hh = params["bias_hh_l0"]
    H = w_hh.shape[1]
    B, S, _ = x.shape

    def step(h, x_t):
        gi = x_t @ w_ih.T + b_ih
        gh = h @ w_hh.T + b_hh
        i_r, i_z, i_n = gi[:, :H], gi[:, H:2 * H], gi[:, 2 * H:]
        h_r, h_z, h_n = gh[:, :H], gh[:, H:2 * H], gh[:, 2 * H:]
        r = jax.nn.sigmoid(i_r + h_r)
        z = jax.nn.sigmoid(i_z + h_z)
        n = jnp.tanh(i_n + r * h_n)
        h_new = (1.0 - z) * n + z * h
        return h_new, None

    h0 = jnp.zeros((B, H), jnp.float32)
    h_last, _ = lax.scan(step, h0, jnp.transpose(x, (1, 0, 2)))
    out = h_last @ params["linear_weight"].T + params["linear_bias"]
    return out.reshape(-1, pred_len, c_out)


def init_params(key, enc_in, d_model, pred_len, c_out):
    """Deterministic init mimicking PyTorch's U(-1/sqrt(H), 1/sqrt(H))."""
    ks = jax.random.split(key, 6)
    H = d_model
    bound_gru = 1.0 / jnp.sqrt(H)
    bound_lin = 1.0 / jnp.sqrt(d_model)
    u = lambda k, shape, b: jax.random.uniform(k, shape, jnp.float32, -b, b)
    return {
        "weight_ih_l0": u(ks[0], (3 * H, enc_in), bound_gru),
        "weight_hh_l0": u(ks[1], (3 * H, H), bound_gru),
        "bias_ih_l0": u(ks[2], (3 * H,), bound_gru),
        "bias_hh_l0": u(ks[3], (3 * H,), bound_gru),
        "linear_weight": u(ks[4], (pred_len * c_out, d_model), bound_lin),
        "linear_bias": u(ks[5], (pred_len * c_out,), bound_lin),
    }


if __name__ == "__main__":
    # Small config consistent with the module's forward.
    B, S = 8, 8          # batch, sequence length
    enc_in = 8           # configs.enc_in
    d_model = 32         # configs.d_model
    pred_len = 4         # configs.pred_len
    c_out = 4            # configs.c_out

    key = jax.random.PRNGKey(0)
    k_x, k_p = jax.random.split(key)
    x = jax.random.normal(k_x, (B, S, enc_in), jnp.float32)
    params = init_params(k_p, enc_in, d_model, pred_len, c_out)

    ref = reference_forward(x, params, pred_len=pred_len, c_out=c_out)

    # 1) f32 MXU operands: exact algorithmic correctness (tight tolerance).
    packed_f32 = prepare_params(params, mxu_dtype=jnp.float32)
    out_f32 = jax.block_until_ready(
        model_forward(x, packed_f32, pred_len=pred_len, c_out=c_out))
    assert out_f32.shape == (B, pred_len, c_out), out_f32.shape
    assert jnp.allclose(out_f32, ref, atol=1e-5, rtol=1e-5), (
        float(jnp.max(jnp.abs(out_f32 - ref))))

    # 2) Default bf16 MXU operands (perf-review item): relaxed tolerance vs.
    #    the f32 reference, accumulation is still f32.
    packed = prepare_params(params)
    out = jax.block_until_ready(
        model_forward(x, packed, pred_len=pred_len, c_out=c_out))
    assert out.shape == (B, pred_len, c_out), out.shape
    assert jnp.allclose(out, ref, atol=5e-2, rtol=5e-2), (
        float(jnp.max(jnp.abs(out - ref))))

    print("KERNEL_OK")
</pallas_src>

<mosaic_0001>
module attributes {stable_mosaic.version = 11 : i64} {
  func.func @gru_linear_kernel(%arg0: memref<64x8xf32, #tpu.memory_space<vmem>>, %arg1: memref<8x128xf32, #tpu.memory_space<vmem>>, %arg2: memref<32x128xf32, #tpu.memory_space<vmem>>, %arg3: memref<1x128xf32, #tpu.memory_space<vmem>>, %arg4: memref<1x32xf32, #tpu.memory_space<vmem>>, %arg5: memref<32x16xf32, #tpu.memory_space<vmem>>, %arg6: memref<1x16xf32, #tpu.memory_space<vmem>>, %arg7: memref<8x16xf32, #tpu.memory_space<vmem>>, %arg8: memref<64x128xf32, #tpu.memory_space<vmem>>) attributes {dimension_semantics = [], scalar_prefetch = 0 : i64, scratch_operands = 1 : i64, tpu.core_type = #tpu.core_type<tc>} {
    %c0 = arith.constant 0 : index
    %c0_0 = arith.constant 0 : index
    %0 = vector.load %arg0[%c0, %c0_0] : memref<64x8xf32, #tpu.memory_space<vmem>>, vector<64x8xf32>
    %c0_1 = arith.constant 0 : index
    %c0_2 = arith.constant 0 : index
    %1 = vector.load %arg1[%c0_1, %c0_2] : memref<8x128xf32, #tpu.memory_space<vmem>>, vector<8x128xf32>
    %cst = arith.constant dense<0.000000e+00> : vector<64x128xf32>
    %2 = tpu.matmul %0, %1, %cst {dimension_numbers = #tpu.dot_dimension_numbers<[1], [0], [0], [1], [0, 0, 1, 1], [], []>} : vector<64x8xf32>, vector<8x128xf32>, vector<64x128xf32> -> vector<64x128xf32>
    %c0_3 = arith.constant 0 : index
    %c0_4 = arith.constant 0 : index
    %3 = vector.load %arg3[%c0_3, %c0_4] : memref<1x128xf32, #tpu.memory_space<vmem>>, vector<1x128xf32>
    %4 = vector.broadcast %3 : vector<1x128xf32> to vector<64x128xf32>
    %5 = arith.addf %2, %4 : vector<64x128xf32>
    %c0_5 = arith.constant 0 : index
    %c0_6 = arith.constant 0 : index
    %6 = vector.load %arg8[%c0_5, %c0_6] : memref<64x128xf32, #tpu.memory_space<vmem>>, vector<64x128xf32>
    tpu.vector_store %arg8[%c0_5, %c0_6], %5 {strides = array<i32>} : memref<64x128xf32, #tpu.memory_space<vmem>>, vector<64x128xf32>,
    %c0_7 = arith.constant 0 : index
    %c0_8 = arith.constant 0 : index
    %7 = vector.load %arg2[%c0_7, %c0_8] : memref<32x128xf32, #tpu.memory_space<vmem>>, vector<32x128xf32>
    %c0_9 = arith.constant 0 : index
    %c0_10 = arith.constant 0 : index
    %8 = vector.load %arg4[%c0_9, %c0_10] : memref<1x32xf32, #tpu.memory_space<vmem>>, vector<1x32xf32>
    %9 = vector.shape_cast %8 : vector<1x32xf32> to vector<1x32xf32>
    %10 = vector.broadcast %9 : vector<1x32xf32> to vector<8x32xf32>
    %cst_11 = arith.constant 0.000000e+00 : f32
    %11 = vector.broadcast %cst_11 : f32 to vector<8x32xf32>
    %c0_i32 = arith.constant 0 : i32
    %c8_i32 = arith.constant 8 : i32
    %12 = arith.muli %c0_i32, %c8_i32 : i32
    %13 = tpu.assume_multiple %12, 8 : i32
    %14 = arith.index_cast %13 : i32 to index
    %c0_12 = arith.constant 0 : index
    %15 = vector.load %arg8[%14, %c0_12] : memref<64x128xf32, #tpu.memory_space<vmem>>, vector<8x128xf32>
    %cst_13 = arith.constant dense<0.000000e+00> : vector<8x128xf32>
    %16 = tpu.matmul %11, %7, %cst_13 {dimension_numbers = #tpu.dot_dimension_numbers<[1], [0], [0], [1], [0, 0, 1, 1], [], []>} : vector<8x32xf32>, vector<32x128xf32>, vector<8x128xf32> -> vector<8x128xf32>
    %17 = vector.extract_strided_slice %15 {offsets = [0, 0], sizes = [8, 64], strides = [1, 1]} : vector<8x128xf32> to vector<8x64xf32>
    %18 = vector.extract_strided_slice %16 {offsets = [0, 0], sizes = [8, 64], strides = [1, 1]} : vector<8x128xf32> to vector<8x64xf32>
    %19 = arith.addf %17, %18 : vector<8x64xf32>
    %20 = arith.negf %19 : vector<8x64xf32>
    %21 = math.exp %20 : vector<8x64xf32>
    %cst_14 = arith.constant 1.000000e+00 : f32
    %22 = vector.broadcast %cst_14 : f32 to vector<8x64xf32>
    %23 = arith.addf %22, %21 : vector<8x64xf32>
    %24 = arith.divf %22, %23 : vector<8x64xf32>
    %25 = vector.extract_strided_slice %24 {offsets = [0, 0], sizes = [8, 32], strides = [1, 1]} : vector<8x64xf32> to vector<8x32xf32>
    %26 = vector.extract_strided_slice %24 {offsets = [0, 32], sizes = [8, 32], strides = [1, 1]} : vector<8x64xf32> to vector<8x32xf32>
    %27 = vector.extract_strided_slice %15 {offsets = [0, 64], sizes = [8, 32], strides = [1, 1]} : vector<8x128xf32> to vector<8x32xf32>
    %28 = vector.extract_strided_slice %16 {offsets = [0, 64], sizes = [8, 32], strides = [1, 1]} : vector<8x128xf32> to vector<8x32xf32>
    %29 = arith.addf %28, %10 : vector<8x32xf32>
    %30 = arith.mulf %25, %29 : vector<8x32xf32>
    %31 = arith.addf %27, %30 : vector<8x32xf32>
    %32 = math.tanh %31 : vector<8x32xf32>
    %cst_15 = arith.constant 1.000000e+00 : f32
    %33 = vector.broadcast %cst_15 : f32 to vector<8x32xf32>
    %34 = arith.subf %33, %26 : vector<8x32xf32>
    %35 = arith.mulf %34, %32 : vector<8x32xf32>
    %36 = arith.mulf %26, %11 : vector<8x32xf32>
    %37 = arith.addf %35, %36 : vector<8x32xf32>
    %c1_i32 = arith.constant 1 : i32
    %c8_i32_16 = arith.constant 8 : i32
    %38 = arith.muli %c1_i32, %c8_i32_16 : i32
    %39 = tpu.assume_multiple %38, 8 : i32
    %40 = arith.index_cast %39 : i32 to index
    %c0_17 = arith.constant 0 : index
    %41 = vector.load %arg8[%40, %c0_17] : memref<64x128xf32, #tpu.memory_space<vmem>>, vector<8x128xf32>
    %cst_18 = arith.constant dense<0.000000e+00> : vector<8x128xf32>
    %42 = tpu.matmul %37, %7, %cst_18 {dimension_numbers = #tpu.dot_dimension_numbers<[1], [0], [0], [1], [0, 0, 1, 1], [], []>} : vector<8x32xf32>, vector<32x128xf32>, vector<8x128xf32> -> vector<8x128xf32>
    %43 = vector.extract_strided_slice %41 {offsets = [0, 0], sizes = [8, 64], strides = [1, 1]} : vector<8x128xf32> to vector<8x64xf32>
    %44 = vector.extract_strided_slice %42 {offsets = [0, 0], sizes = [8, 64], strides = [1, 1]} : vector<8x128xf32> to vector<8x64xf32>
    %45 = arith.addf %43, %44 : vector<8x64xf32>
    %46 = arith.negf %45 : vector<8x64xf32>
    %47 = math.exp %46 : vector<8x64xf32>
    %cst_19 = arith.constant 1.000000e+00 : f32
    %48 = vector.broadcast %cst_19 : f32 to vector<8x64xf32>
    %49 = arith.addf %48, %47 : vector<8x64xf32>
    %50 = arith.divf %48, %49 : vector<8x64xf32>
    %51 = vector.extract_strided_slice %50 {offsets = [0, 0], sizes = [8, 32], strides = [1, 1]} : vector<8x64xf32> to vector<8x32xf32>
    %52 = vector.extract_strided_slice %50 {offsets = [0, 32], sizes = [8, 32], strides = [1, 1]} : vector<8x64xf32> to vector<8x32xf32>
    %53 = vector.extract_strided_slice %41 {offsets = [0, 64], sizes = [8, 32], strides = [1, 1]} : vector<8x128xf32> to vector<8x32xf32>
    %54 = vector.extract_strided_slice %42 {offsets = [0, 64], sizes = [8, 32], strides = [1, 1]} : vector<8x128xf32> to vector<8x32xf32>
    %55 = arith.addf %54, %10 : vector<8x32xf32>
    %56 = arith.mulf %51, %55 : vector<8x32xf32>
    %57 = arith.addf %53, %56 : vector<8x32xf32>
    %58 = math.tanh %57 : vector<8x32xf32>
    %cst_20 = arith.constant 1.000000e+00 : f32
    %59 = vector.broadcast %cst_20 : f32 to vector<8x32xf32>
    %60 = arith.subf %59, %52 : vector<8x32xf32>
    %61 = arith.mulf %60, %58 : vector<8x32xf32>
    %62 = arith.mulf %52, %37 : vector<8x32xf32>
    %63 = arith.addf %61, %62 : vector<8x32xf32>
    %c2_i32 = arith.constant 2 : i32
    %c8_i32_21 = arith.constant 8 : i32
    %64 = arith.muli %c2_i32, %c8_i32_21 : i32
    %65 = tpu.assume_multiple %64, 8 : i32
    %66 = arith.index_cast %65 : i32 to index
    %c0_22 = arith.constant 0 : index
    %67 = vector.load %arg8[%66, %c0_22] : memref<64x128xf32, #tpu.memory_space<vmem>>, vector<8x128xf32>
    %cst_23 = arith.constant dense<0.000000e+00> : vector<8x128xf32>
    %68 = tpu.matmul %63, %7, %cst_23 {dimension_numbers = #tpu.dot_dimension_numbers<[1], [0], [0], [1], [0, 0, 1, 1], [], []>} : vector<8x32xf32>, vector<32x128xf32>, vector<8x128xf32> -> vector<8x128xf32>
    %69 = vector.extract_strided_slice %67 {offsets = [0, 0], sizes = [8, 64], strides = [1, 1]} : vector<8x128xf32> to vector<8x64xf32>
    %70 = vector.extract_strided_slice %68 {offsets = [0, 0], sizes = [8, 64], strides = [1, 1]} : vector<8x128xf32> to vector<8x64xf32>
    %71 = arith.addf %69, %70 : vector<8x64xf32>
    %72 = arith.negf %71 : vector<8x64xf32>
    %73 = math.exp %72 : vector<8x64xf32>
    %cst_24 = arith.constant 1.000000e+00 : f32
    %74 = vector.broadcast %cst_24 : f32 to vector<8x64xf32>
    %75 = arith.addf %74, %73 : vector<8x64xf32>
    %76 = arith.divf %74, %75 : vector<8x64xf32>
    %77 = vector.extract_strided_slice %76 {offsets = [0, 0], sizes = [8, 32], strides = [1, 1]} : vector<8x64xf32> to vector<8x32xf32>
    %78 = vector.extract_strided_slice %76 {offsets = [0, 32], sizes = [8, 32], strides = [1, 1]} : vector<8x64xf32> to vector<8x32xf32>
    %79 = vector.extract_strided_slice %67 {offsets = [0, 64], sizes = [8, 32], strides = [1, 1]} : vector<8x128xf32> to vector<8x32xf32>
    %80 = vector.extract_strided_slice %68 {offsets = [0, 64], sizes = [8, 32], strides = [1, 1]} : vector<8x128xf32> to vector<8x32xf32>
    %81 = arith.addf %80, %10 : vector<8x32xf32>
    %82 = arith.mulf %77, %81 : vector<8x32xf32>
    %83 = arith.addf %79, %82 : vector<8x32xf32>
    %84 = math.tanh %83 : vector<8x32xf32>
    %cst_25 = arith.constant 1.000000e+00 : f32
    %85 = vector.broadcast %cst_25 : f32 to vector<8x32xf32>
    %86 = arith.subf %85, %78 : vector<8x32xf32>
    %87 = arith.mulf %86, %84 : vector<8x32xf32>
    %88 = arith.mulf %78, %63 : vector<8x32xf32>
    %89 = arith.addf %87, %88 : vector<8x32xf32>
    %c3_i32 = arith.constant 3 : i32
    %c8_i32_26 = arith.constant 8 : i32
    %90 = arith.muli %c3_i32, %c8_i32_26 : i32
    %91 = tpu.assume_multiple %90, 8 : i32
    %92 = arith.index_cast %91 : i32 to index
    %c0_27 = arith.constant 0 : index
    %93 = vector.load %arg8[%92, %c0_27] : memref<64x128xf32, #tpu.memory_space<vmem>>, vector<8x128xf32>
    %cst_28 = arith.constant dense<0.000000e+00> : vector<8x128xf32>
    %94 = tpu.matmul %89, %7, %cst_28 {dimension_numbers = #tpu.dot_dimension_numbers<[1], [0], [0], [1], [0, 0, 1, 1], [], []>} : vector<8x32xf32>, vector<32x128xf32>, vector<8x128xf32> -> vector<8x128xf32>
    %95 = vector.extract_strided_slice %93 {offsets = [0, 0], sizes = [8, 64], strides = [1, 1]} : vector<8x128xf32> to vector<8x64xf32>
    %96 = vector.extract_strided_slice %94 {offsets = [0, 0], sizes = [8, 64], strides = [1, 1]} : vector<8x128xf32> to vector<8x64xf32>
    %97 = arith.addf %95, %96 : vector<8x64xf32>
    %98 = arith.negf %97 : vector<8x64xf32>
    %99 = math.exp %98 : vector<8x64xf32>
    %cst_29 = arith.constant 1.000000e+00 : f32
    %100 = vector.broadcast %cst_29 : f32 to vector<8x64xf32>
    %101 = arith.addf %100, %99 : vector<8x64xf32>
    %102 = arith.divf %100, %101 : vector<8x64xf32>
    %103 = vector.extract_strided_slice %102 {offsets = [0, 0], sizes = [8, 32], strides = [1, 1]} : vector<8x64xf32> to vector<8x32xf32>
    %104 = vector.extract_strided_slice %102 {offsets = [0, 32], sizes = [8, 32], strides = [1, 1]} : vector<8x64xf32> to vector<8x32xf32>
    %105 = vector.extract_strided_slice %93 {offsets = [0, 64], sizes = [8, 32], strides = [1, 1]} : vector<8x128xf32> to vector<8x32xf32>
    %106 = vector.extract_strided_slice %94 {offsets = [0, 64], sizes = [8, 32], strides = [1, 1]} : vector<8x128xf32> to vector<8x32xf32>
    %107 = arith.addf %106, %10 : vector<8x32xf32>
    %108 = arith.mulf %103, %107 : vector<8x32xf32>
    %109 = arith.addf %105, %108 : vector<8x32xf32>
    %110 = math.tanh %109 : vector<8x32xf32>
    %cst_30 = arith.constant 1.000000e+00 : f32
    %111 = vector.broadcast %cst_30 : f32 to vector<8x32xf32>
    %112 = arith.subf %111, %104 : vector<8x32xf32>
    %113 = arith.mulf %112, %110 : vector<8x32xf32>
    %114 = arith.mulf %104, %89 : vector<8x32xf32>
    %115 = arith.addf %113, %114 : vector<8x32xf32>
    %c4_i32 = arith.constant 4 : i32
    %c8_i32_31 = arith.constant 8 : i32
    %116 = arith.muli %c4_i32, %c8_i32_31 : i32
    %117 = tpu.assume_multiple %116, 8 : i32
    %118 = arith.index_cast %117 : i32 to index
    %c0_32 = arith.constant 0 : index
    %119 = vector.load %arg8[%118, %c0_32] : memref<64x128xf32, #tpu.memory_space<vmem>>, vector<8x128xf32>
    %cst_33 = arith.constant dense<0.000000e+00> : vector<8x128xf32>
    %120 = tpu.matmul %115, %7, %cst_33 {dimension_numbers = #tpu.dot_dimension_numbers<[1], [0], [0], [1], [0, 0, 1, 1], [], []>} : vector<8x32xf32>, vector<32x128xf32>, vector<8x128xf32> -> vector<8x128xf32>
    %121 = vector.extract_strided_slice %119 {offsets = [0, 0], sizes = [8, 64], strides = [1, 1]} : vector<8x128xf32> to vector<8x64xf32>
    %122 = vector.extract_strided_slice %120 {offsets = [0, 0], sizes = [8, 64], strides = [1, 1]} : vector<8x128xf32> to vector<8x64xf32>
    %123 = arith.addf %121, %122 : vector<8x64xf32>
    %124 = arith.negf %123 : vector<8x64xf32>
    %125 = math.exp %124 : vector<8x64xf32>
    %cst_34 = arith.constant 1.000000e+00 : f32
    %126 = vector.broadcast %cst_34 : f32 to vector<8x64xf32>
    %127 = arith.addf %126, %125 : vector<8x64xf32>
    %128 = arith.divf %126, %127 : vector<8x64xf32>
    %129 = vector.extract_strided_slice %128 {offsets = [0, 0], sizes = [8, 32], strides = [1, 1]} : vector<8x64xf32> to vector<8x32xf32>
    %130 = vector.extract_strided_slice %128 {offsets = [0, 32], sizes = [8, 32], strides = [1, 1]} : vector<8x64xf32> to vector<8x32xf32>
    %131 = vector.extract_strided_slice %119 {offsets = [0, 64], sizes = [8, 32], strides = [1, 1]} : vector<8x128xf32> to vector<8x32xf32>
    %132 = vector.extract_strided_slice %120 {offsets = [0, 64], sizes = [8, 32], strides = [1, 1]} : vector<8x128xf32> to vector<8x32xf32>
    %133 = arith.addf %132, %10 : vector<8x32xf32>
    %134 = arith.mulf %129, %133 : vector<8x32xf32>
    %135 = arith.addf %131, %134 : vector<8x32xf32>
    %136 = math.tanh %135 : vector<8x32xf32>
    %cst_35 = arith.constant 1.000000e+00 : f32
    %137 = vector.broadcast %cst_35 : f32 to vector<8x32xf32>
    %138 = arith.subf %137, %130 : vector<8x32xf32>
    %139 = arith.mulf %138, %136 : vector<8x32xf32>
    %140 = arith.mulf %130, %115 : vector<8x32xf32>
    %141 = arith.addf %139, %140 : vector<8x32xf32>
    %c5_i32 = arith.constant 5 : i32
    %c8_i32_36 = arith.constant 8 : i32
    %142 = arith.muli %c5_i32, %c8_i32_36 : i32
    %143 = tpu.assume_multiple %142, 8 : i32
    %144 = arith.index_cast %143 : i32 to index
    %c0_37 = arith.constant 0 : index
    %145 = vector.load %arg8[%144, %c0_37] : memref<64x128xf32, #tpu.memory_space<vmem>>, vector<8x128xf32>
    %cst_38 = arith.constant dense<0.000000e+00> : vector<8x128xf32>
    %146 = tpu.matmul %141, %7, %cst_38 {dimension_numbers = #tpu.dot_dimension_numbers<[1], [0], [0], [1], [0, 0, 1, 1], [], []>} : vector<8x32xf32>, vector<32x128xf32>, vector<8x128xf32> -> vector<8x128xf32>
    %147 = vector.extract_strided_slice %145 {offsets = [0, 0], sizes = [8, 64], strides = [1, 1]} : vector<8x128xf32> to vector<8x64xf32>
    %148 = vector.extract_strided_slice %146 {offsets = [0, 0], sizes = [8, 64], strides = [1, 1]} : vector<8x128xf32> to vector<8x64xf32>
    %149 = arith.addf %147, %148 : vector<8x64xf32>
    %150 = arith.negf %149 : vector<8x64xf32>
    %151 = math.exp %150 : vector<8x64xf32>
    %cst_39 = arith.constant 1.000000e+00 : f32
    %152 = vector.broadcast %cst_39 : f32 to vector<8x64xf32>
    %153 = arith.addf %152, %151 : vector<8x64xf32>
    %154 = arith.divf %152, %153 : vector<8x64xf32>
    %155 = vector.extract_strided_slice %154 {offsets = [0, 0], sizes = [8, 32], strides = [1, 1]} : vector<8x64xf32> to vector<8x32xf32>
    %156 = vector.extract_strided_slice %154 {offsets = [0, 32], sizes = [8, 32], strides = [1, 1]} : vector<8x64xf32> to vector<8x32xf32>
    %157 = vector.extract_strided_slice %145 {offsets = [0, 64], sizes = [8, 32], strides = [1, 1]} : vector<8x128xf32> to vector<8x32xf32>
    %158 = vector.extract_strided_slice %146 {offsets = [0, 64], sizes = [8, 32], strides = [1, 1]} : vector<8x128xf32> to vector<8x32xf32>
    %159 = arith.addf %158, %10 : vector<8x32xf32>
    %160 = arith.mulf %155, %159 : vector<8x32xf32>
    %161 = arith.addf %157, %160 : vector<8x32xf32>
    %162 = math.tanh %161 : vector<8x32xf32>
    %cst_40 = arith.constant 1.000000e+00 : f32
    %163 = vector.broadcast %cst_40 : f32 to vector<8x32xf32>
    %164 = arith.subf %163, %156 : vector<8x32xf32>
    %165 = arith.mulf %164, %162 : vector<8x32xf32>
    %166 = arith.mulf %156, %141 : vector<8x32xf32>
    %167 = arith.addf %165, %166 : vector<8x32xf32>
    %c6_i32 = arith.constant 6 : i32
    %c8_i32_41 = arith.constant 8 : i32
    %168 = arith.muli %c6_i32, %c8_i32_41 : i32
    %169 = tpu.assume_multiple %168, 8 : i32
    %170 = arith.index_cast %169 : i32 to index
    %c0_42 = arith.constant 0 : index
    %171 = vector.load %arg8[%170, %c0_42] : memref<64x128xf32, #tpu.memory_space<vmem>>, vector<8x128xf32>
    %cst_43 = arith.constant dense<0.000000e+00> : vector<8x128xf32>
    %172 = tpu.matmul %167, %7, %cst_43 {dimension_numbers = #tpu.dot_dimension_numbers<[1], [0], [0], [1], [0, 0, 1, 1], [], []>} : vector<8x32xf32>, vector<32x128xf32>, vector<8x128xf32> -> vector<8x128xf32>
    %173 = vector.extract_strided_slice %171 {offsets = [0, 0], sizes = [8, 64], strides = [1, 1]} : vector<8x128xf32> to vector<8x64xf32>
    %174 = vector.extract_strided_slice %172 {offsets = [0, 0], sizes = [8, 64], strides = [1, 1]} : vector<8x128xf32> to vector<8x64xf32>
    %175 = arith.addf %173, %174 : vector<8x64xf32>
    %176 = arith.negf %175 : vector<8x64xf32>
    %177 = math.exp %176 : vector<8x64xf32>
    %cst_44 = arith.constant 1.000000e+00 : f32
    %178 = vector.broadcast %cst_44 : f32 to vector<8x64xf32>
    %179 = arith.addf %178, %177 : vector<8x64xf32>
    %180 = arith.divf %178, %179 : vector<8x64xf32>
    %181 = vector.extract_strided_slice %180 {offsets = [0, 0], sizes = [8, 32], strides = [1, 1]} : vector<8x64xf32> to vector<8x32xf32>
    %182 = vector.extract_strided_slice %180 {offsets = [0, 32], sizes = [8, 32], strides = [1, 1]} : vector<8x64xf32> to vector<8x32xf32>
    %183 = vector.extract_strided_slice %171 {offsets = [0, 64], sizes = [8, 32], strides = [1, 1]} : vector<8x128xf32> to vector<8x32xf32>
    %184 = vector.extract_strided_slice %172 {offsets = [0, 64], sizes = [8, 32], strides = [1, 1]} : vector<8x128xf32> to vector<8x32xf32>
    %185 = arith.addf %184, %10 : vector<8x32xf32>
    %186 = arith.mulf %181, %185 : vector<8x32xf32>
    %187 = arith.addf %183, %186 : vector<8x32xf32>
    %188 = math.tanh %187 : vector<8x32xf32>
    %cst_45 = arith.constant 1.000000e+00 : f32
    %189 = vector.broadcast %cst_45 : f32 to vector<8x32xf32>
    %190 = arith.subf %189, %182 : vector<8x32xf32>
    %191 = arith.mulf %190, %188 : vector<8x32xf32>
    %192 = arith.mulf %182, %167 : vector<8x32xf32>
    %193 = arith.addf %191, %192 : vector<8x32xf32>
    %c7_i32 = arith.constant 7 : i32
    %c8_i32_46 = arith.constant 8 : i32
    %194 = arith.muli %c7_i32, %c8_i32_46 : i32
    %195 = tpu.assume_multiple %194, 8 : i32
    %196 = arith.index_cast %195 : i32 to index
    %c0_47 = arith.constant 0 : index
    %197 = vector.load %arg8[%196, %c0_47] : memref<64x128xf32, #tpu.memory_space<vmem>>, vector<8x128xf32>
    %cst_48 = arith.constant dense<0.000000e+00> : vector<8x128xf32>
    %198 = tpu.matmul %193, %7, %cst_48 {dimension_numbers = #tpu.dot_dimension_numbers<[1], [0], [0], [1], [0, 0, 1, 1], [], []>} : vector<8x32xf32>, vector<32x128xf32>, vector<8x128xf32> -> vector<8x128xf32>
    %199 = vector.extract_strided_slice %197 {offsets = [0, 0], sizes = [8, 64], strides = [1, 1]} : vector<8x128xf32> to vector<8x64xf32>
    %200 = vector.extract_strided_slice %198 {offsets = [0, 0], sizes = [8, 64], strides = [1, 1]} : vector<8x128xf32> to vector<8x64xf32>
    %201 = arith.addf %199, %200 : vector<8x64xf32>
    %202 = arith.negf %201 : vector<8x64xf32>
    %203 = math.exp %202 : vector<8x64xf32>
    %cst_49 = arith.constant 1.000000e+00 : f32
    %204 = vector.broadcast %cst_49 : f32 to vector<8x64xf32>
    %205 = arith.addf %204, %203 : vector<8x64xf32>
    %206 = arith.divf %204, %205 : vector<8x64xf32>
    %207 = vector.extract_strided_slice %206 {offsets = [0, 0], sizes = [8, 32], strides = [1, 1]} : vector<8x64xf32> to vector<8x32xf32>
    %208 = vector.extract_strided_slice %206 {offsets = [0, 32], sizes = [8, 32], strides = [1, 1]} : vector<8x64xf32> to vector<8x32xf32>
    %209 = vector.extract_strided_slice %197 {offsets = [0, 64], sizes = [8, 32], strides = [1, 1]} : vector<8x128xf32> to vector<8x32xf32>
    %210 = vector.extract_strided_slice %198 {offsets = [0, 64], sizes = [8, 32], strides = [1, 1]} : vector<8x128xf32> to vector<8x32xf32>
    %211 = arith.addf %210, %10 : vector<8x32xf32>
    %212 = arith.mulf %207, %211 : vector<8x32xf32>
    %213 = arith.addf %209, %212 : vector<8x32xf32>
    %214 = math.tanh %213 : vector<8x32xf32>
    %cst_50 = arith.constant 1.000000e+00 : f32
    %215 = vector.broadcast %cst_50 : f32 to vector<8x32xf32>
    %216 = arith.subf %215, %208 : vector<8x32xf32>
    %217 = arith.mulf %216, %214 : vector<8x32xf32>
    %218 = arith.mulf %208, %193 : vector<8x32xf32>
    %219 = arith.addf %217, %218 : vector<8x32xf32>
    %c8_i32_51 = arith.constant 8 : i32
    %c0_52 = arith.constant 0 : index
    %c0_53 = arith.constant 0 : index
    %220 = vector.load %arg5[%c0_52, %c0_53] : memref<32x16xf32, #tpu.memory_space<vmem>>, vector<32x16xf32>
    %cst_54 = arith.constant dense<0.000000e+00> : vector<8x16xf32>
    %221 = tpu.matmul %219, %220, %cst_54 {dimension_numbers = #tpu.dot_dimension_numbers<[1], [0], [0], [1], [0, 0, 1, 1], [], []>} : vector<8x32xf32>, vector<32x16xf32>, vector<8x16xf32> -> vector<8x16xf32>
    %c0_55 = arith.constant 0 : index
    %c0_56 = arith.constant 0 : index
    %222 = vector.load %arg6[%c0_55, %c0_56] : memref<1x16xf32, #tpu.memory_space<vmem>>, vector<1x16xf32>
    %223 = vector.broadcast %222 : vector<1x16xf32> to vector<8x16xf32>
    %224 = arith.addf %221, %223 : vector<8x16xf32>
    %c0_57 = arith.constant 0 : index
    %c0_58 = arith.constant 0 : index
    %225 = vector.load %arg7[%c0_57, %c0_58] : memref<8x16xf32, #tpu.memory_space<vmem>>, vector<8x16xf32>
    tpu.vector_store %arg7[%c0_57, %c0_58], %224 {strides = array<i32>} : memref<8x16xf32, #tpu.memory_space<vmem>>, vector<8x16xf32>,
    return
  }
}

</mosaic_0001>

<llo_original>
// kernel: model_forward.1
$region0: #{model_forward.1}
  #allocation0 [shape = 'u32[]', space=smem, size = 0x4, offset = 0x4, fixed_abs, tag = 'smem constant byte address 0x4 - core index']
  #allocation1 [shape = 'u32[144,128]{1,0:T(1,128)}', space=vmem, size = 0x12000, scoped, tag = 'internal scratch']
  #allocation2 [shape = 'f32[64,128]{1,0:T(8,128)}', space=vmem, size = 0x8000, scoped, tag = 'scratch operand']
  %s0 = inlined_call_operand.vmem [shape: f32[64,8], index: 0, kind: input, shape index: {}]
  %s1 = inlined_call_operand.vmem [shape: f32[8,128], index: 1, kind: input, shape index: {}]
  %s2 = inlined_call_operand.vmem [shape: f32[32,128], index: 2, kind: input, shape index: {}]
  %s3 = inlined_call_operand.vmem [shape: f32[1,128], index: 3, kind: input, shape index: {}]
  %s4 = inlined_call_operand.vmem [shape: f32[1,32], index: 4, kind: input, shape index: {}]
  %s5 = inlined_call_operand.vmem [shape: f32[32,16], index: 5, kind: input, shape index: {}]
  %s6 = inlined_call_operand.vmem [shape: f32[1,16], index: 6, kind: input, shape index: {}]
  %s7 = inlined_call_operand.vmem [shape: f32[8,16], index: 7, kind: output, shape index: {}]
  %s8 = sld [smem:[#allocation0]]
  $region38: #{model_forward.1} parent=0
    _
  %s10 = ssub.s32 1, %s8
  %s11 = scalar_select 0, %s10, %s8
  // Predicated region
  $region2: #{model_forward.1} parent=0 // pred_check
    _
  $region3: #{model_forward.1} parent=0 // pred_check_branch
    %13 = sbr.rel (0) target = $region5
  $region4: #{model_forward.1} parent=0 // pred_region
    _
  $region5: #{model_forward.1} parent=0 // pred_fallthru
    _
  // Predicated region
  $region6: #{model_forward.1} parent=0 // pred_check
    _
  $region7: #{model_forward.1} parent=0 // pred_check_branch
    %15 = sbr.rel (0) target = $region9
  $region8: #{model_forward.1} parent=0 // pred_region
    _
  $region9: #{model_forward.1} parent=0 // pred_fallthru
    _
  // Predicated region
  $region10: #{model_forward.1} parent=0 // pred_check
    _
  $region11: #{model_forward.1} parent=0 // pred_check_branch
    %17 = sbr.rel (0) target = $region13
  $region12: #{model_forward.1} parent=0 // pred_region
    _
  $region13: #{model_forward.1} parent=0 // pred_fallthru
    _
  // Predicated region
  $region14: #{model_forward.1} parent=0 // pred_check
    _
  $region15: #{model_forward.1} parent=0 // pred_check_branch
    %19 = sbr.rel (0) target = $region17
  $region16: #{model_forward.1} parent=0 // pred_region
    _
  $region17: #{model_forward.1} parent=0 // pred_fallthru
    _
  // Predicated region
  $region18: #{model_forward.1} parent=0 // pred_check
    _
  $region19: #{model_forward.1} parent=0 // pred_check_branch
    %21 = sbr.rel (0) target = $region21
  $region20: #{model_forward.1} parent=0 // pred_region
    _
  $region21: #{model_forward.1} parent=0 // pred_fallthru
    _
  // Predicated region
  $region22: #{model_forward.1} parent=0 // pred_check
    _
  $region23: #{model_forward.1} parent=0 // pred_check_branch
    %23 = sbr.rel (0) target = $region25
  $region24: #{model_forward.1} parent=0 // pred_region
    _
  $region25: #{model_forward.1} parent=0 // pred_fallthru
    _
  // Predicated region
  $region26: #{model_forward.1} parent=0 // pred_check
    _
  $region27: #{model_forward.1} parent=0 // pred_check_branch
    %25 = sbr.rel (0) target = $region29
  $region28: #{model_forward.1} parent=0 // pred_region
    _
  $region29: #{model_forward.1} parent=0 // pred_fallthru
    _
  %v26 = vld [vmem:[%s0] sm:$0xff]
  %v27 = vld [vmem:[%s0 + $0x8] sm:$0xff]
  %v28 = vld [vmem:[%s0 + $0x10] sm:$0xff]
  %v29 = vld [vmem:[%s0 + $0x18] sm:$0xff]
  %v30 = vld [vmem:[%s0 + $0x20] sm:$0xff]
  %v31 = vld [vmem:[%s0 + $0x28] sm:$0xff]
  %v32 = vld [vmem:[%s0 + $0x30] sm:$0xff]
  %v33 = vld [vmem:[%s0 + $0x38] sm:$0xff]
  %v34 = vld [vmem:[%s1] sm:$0xff]
  %v35 = vld [vmem:[%s3] sm:$0x1]
  %v37 = vlaneseq
  %v38 = vshrl.u32 %v37, 7
  %v39 = vsub.s32 0, %v38
  %v40 = vrot.slane %v35, %v39
  %vm42 = vcmask 64512
  %v44 = vsel %vm42, %v26, 0
  %v47 = vsel %vm42, %v27, 0
  %v50 = vsel %vm42, %v28, 0
  %v53 = vsel %vm42, %v29, 0
  %v56 = vsel %vm42, %v30, 0
  %v59 = vsel %vm42, %v31, 0
  %v62 = vsel %vm42, %v32, 0
  %v65 = vsel %vm42, %v33, 0
  %67 = vmatprep.subr.mxu0 0.0
  %68 = vmatpush1.msra.mxu0 %v34
  %69 = vmatprep.subr.mxu0 0.0
  %70 = vmatpush1.msra.mxu0 0.0
  %71 = vmatprep.subr.mxu0 0.0
  %72 = vmatpush1.msra.mxu0 0.0
  %73 = vmatprep.subr.mxu0 0.0
  %74 = vmatpush1.msra.mxu0 0.0
  %75 = vmatprep.subr.mxu0 0.0
  %76 = vmatpush1.msra.mxu0 0.0
  %77 = vmatprep.subr.mxu0 0.0
  %78 = vmatpush1.msra.mxu0 0.0
  %79 = vmatprep.subr.mxu0 0.0
  %80 = vmatpush1.msra.mxu0 0.0
  %81 = vmatprep.subr.mxu0 0.0
  %82 = vmatpush1.msra.mxu0 0.0
  %83 = vmatprep.subr.mxu0 0.0
  %84 = vmatpush1.msra.mxu0 0.0
  %85 = vmatprep.subr.mxu0 0.0
  %86 = vmatpush1.msra.mxu0 0.0
  %87 = vmatprep.subr.mxu0 0.0
  %88 = vmatpush1.msra.mxu0 0.0
  %89 = vmatprep.subr.mxu0 0.0
  %90 = vmatpush1.msra.mxu0 0.0
  %91 = vmatprep.subr.mxu0 0.0
  %92 = vmatpush1.msra.mxu0 0.0
  %93 = vmatprep.subr.mxu0 0.0
  %94 = vmatpush1.msra.mxu0 0.0
  %95 = vmatprep.subr.mxu0 0.0
  %96 = vmatpush1.msra.mxu0 0.0
  %97 = vmatprep.subr.mxu0 0.0
  %98 = vmatpush1.msra.mxu0 0.0
  %99 = vmatprep.subr.mxu0 0.0
  %100 = vmatpush1.msra.mxu0 0.0
  %101 = vmatprep.subr.mxu0 0.0
  %102 = vmatpush1.msra.mxu0 0.0
  %103 = vmatprep.subr.mxu0 0.0
  %104 = vmatpush1.msra.mxu0 0.0
  %105 = vmatprep.subr.mxu0 0.0
  %106 = vmatpush1.msra.mxu0 0.0
  %107 = vmatprep.subr.mxu0 0.0
  %108 = vmatpush1.msra.mxu0 0.0
  %109 = vmatprep.subr.mxu0 0.0
  %110 = vmatpush1.msra.mxu0 0.0
  %111 = vmatprep.subr.mxu0 0.0
  %112 = vmatpush1.msra.mxu0 0.0
  %113 = vmatprep.subr.mxu0 0.0
  %114 = vmatpush1.msra.mxu0 0.0
  %115 = vmatprep.subr.mxu0 0.0
  %116 = vmatpush1.msra.mxu0 0.0
  %117 = vmatprep.subr.mxu0 0.0
  %118 = vmatpush1.msra.mxu0 0.0
  %119 = vmatprep.subr.mxu0 0.0
  %120 = vmatpush1.msra.mxu0 0.0
  %121 = vmatprep.subr.mxu0 0.0
  %122 = vmatpush1.msra.mxu0 0.0
  %123 = vmatprep.subr.mxu0 0.0
  %124 = vmatpush1.msra.mxu0 0.0
  %125 = vmatprep.subr.mxu0 0.0
  %126 = vmatpush1.msra.mxu0 0.0
  %127 = vmatprep.subr.mxu0 0.0
  %128 = vmatpush1.msra.mxu0 0.0
  %129 = vmatprep.subr.mxu0 0.0
  %130 = vmatpush1.msra.mxu0 0.0
  %131 = vmatprep.mubr.f32.mxu0 0.0
  %132 = vmatmul.mubr.f32.gmra.mrb[0].mxu0 %v44
  %v133 = vpop.f32.mrb[0].mxu0
  %v134 = vadd.f32 %v40, %v133
  %v135 = vpop.f32.mrb[0].mxu0
  %136 = vmatprep.mubr.f32.mxu0 0.0
  %137 = vmatmul.mubr.f32.gmra.mrb[0].mxu0 %v47
  %v138 = vpop.f32.mrb[0].mxu0
  %v139 = vadd.f32 %v40, %v138
  %v140 = vpop.f32.mrb[0].mxu0
  %141 = vmatprep.mubr.f32.mxu0 0.0
  %142 = vmatmul.mubr.f32.gmra.mrb[0].mxu0 %v50
  %v143 = vpop.f32.mrb[0].mxu0
  %v144 = vadd.f32 %v40, %v143
  %v145 = vpop.f32.mrb[0].mxu0
  %146 = vmatprep.mubr.f32.mxu0 0.0
  %147 = vmatmul.mubr.f32.gmra.mrb[0].mxu0 %v53
  %v148 = vpop.f32.mrb[0].mxu0
  %v149 = vadd.f32 %v40, %v148
  %v150 = vpop.f32.mrb[0].mxu0
  %151 = vmatprep.mubr.f32.mxu0 0.0
  %152 = vmatmul.mubr.f32.gmra.mrb[0].mxu0 %v56
  %v153 = vpop.f32.mrb[0].mxu0
  %v154 = vadd.f32 %v40, %v153
  %v155 = vpop.f32.mrb[0].mxu0
  %156 = vmatprep.mubr.f32.mxu0 0.0
  %157 = vmatmul.mubr.f32.gmra.mrb[0].mxu0 %v59
  %v158 = vpop.f32.mrb[0].mxu0
  %v159 = vadd.f32 %v40, %v158
  %v160 = vpop.f32.mrb[0].mxu0
  %161 = vmatprep.mubr.f32.mxu0 0.0
  %162 = vmatmul.mubr.f32.gmra.mrb[0].mxu0 %v62
  %v163 = vpop.f32.mrb[0].mxu0
  %v164 = vadd.f32 %v40, %v163
  %v165 = vpop.f32.mrb[0].mxu0
  %166 = vmatprep.mubr.f32.mxu0 0.0
  %167 = vmatmul.mubr.f32.gmra.mrb[0].mxu0 %v65
  %v168 = vpop.f32.mrb[0].mxu0
  %v169 = vadd.f32 %v40, %v168
  %v170 = vpop.f32.mrb[0].mxu0
  %171 = vdwg.mxu0
  %172 = vst [vmem:[#allocation2] sm:$0xff] %v134
  %173 = vst [vmem:[#allocation2 + $0x8] sm:$0xff] %v139
  %174 = vst [vmem:[#allocation2 + $0x10] sm:$0xff] %v144
  %175 = vst [vmem:[#allocation2 + $0x18] sm:$0xff] %v149
  %176 = vst [vmem:[#allocation2 + $0x20] sm:$0xff] %v154
  %177 = vst [vmem:[#allocation2 + $0x28] sm:$0xff] %v159
  %178 = vst [vmem:[#allocation2 + $0x30] sm:$0xff] %v164
  %179 = vst [vmem:[#allocation2 + $0x38] sm:$0xff] %v169
  %v180 = vld [vmem:[%s2] sm:$0xff]
  %v181 = vld [vmem:[%s2 + $0x8] sm:$0xff]
  %v182 = vld [vmem:[%s2 + $0x10] sm:$0xff]
  %v183 = vld [vmem:[%s2 + $0x18] sm:$0xff]
  %v184 = vld [vmem:[%s4] sm:$0x1]
  %v186 = vlaneseq
  %v187 = vshrl.u32 %v186, 7
  %v188 = vsub.s32 0, %v187
  %v189 = vrot.slane %v184, %v188
  %v190 = vld [vmem:[#allocation2] sm:$0xff]
  %vm191 = vcmask 261120
  %v193 = vsel %vm191, 0.0, 0
  %195 = vmatprep.subr.mxu0 0.0
  %196 = vmatpush1.msra.mxu0 %v180
  %197 = vmatprep.subr.mxu0 0.0
  %198 = vmatpush1.msra.mxu0 %v181
  %199 = vmatprep.subr.mxu0 0.0
  %200 = vmatpush1.msra.mxu0 %v182
  %201 = vmatprep.subr.mxu0 0.0
  %202 = vmatpush1.msra.mxu0 %v183
  %203 = vmatprep.subr.mxu0 0.0
  %204 = vmatpush1.msra.mxu0 0.0
  %205 = vmatprep.subr.mxu0 0.0
  %206 = vmatpush1.msra.mxu0 0.0
  %207 = vmatprep.subr.mxu0 0.0
  %208 = vmatpush1.msra.mxu0 0.0
  %209 = vmatprep.subr.mxu0 0.0
  %210 = vmatpush1.msra.mxu0 0.0
  %211 = vmatprep.subr.mxu0 0.0
  %212 = vmatpush1.msra.mxu0 0.0
  %213 = vmatprep.subr.mxu0 0.0
  %214 = vmatpush1.msra.mxu0 0.0
  %215 = vmatprep.subr.mxu0 0.0
  %216 = vmatpush1.msra.mxu0 0.0
  %217 = vmatprep.subr.mxu0 0.0
  %218 = vmatpush1.msra.mxu0 0.0
  %219 = vmatprep.subr.mxu0 0.0
  %220 = vmatpush1.msra.mxu0 0.0
  %221 = vmatprep.subr.mxu0 0.0
  %222 = vmatpush1.msra.mxu0 0.0
  %223 = vmatprep.subr.mxu0 0.0
  %224 = vmatpush1.msra.mxu0 0.0
  %225 = vmatprep.subr.mxu0 0.0
  %226 = vmatpush1.msra.mxu0 0.0
  %227 = vmatprep.subr.mxu0 0.0
  %228 = vmatpush1.msra.mxu0 0.0
  %229 = vmatprep.subr.mxu0 0.0
  %230 = vmatpush1.msra.mxu0 0.0
  %231 = vmatprep.subr.mxu0 0.0
  %232 = vmatpush1.msra.mxu0 0.0
  %233 = vmatprep.subr.mxu0 0.0
  %234 = vmatpush1.msra.mxu0 0.0
  %235 = vmatprep.subr.mxu0 0.0
  %236 = vmatpush1.msra.mxu0 0.0
  %237 = vmatprep.subr.mxu0 0.0
  %238 = vmatpush1.msra.mxu0 0.0
  %239 = vmatprep.subr.mxu0 0.0
  %240 = vmatpush1.msra.mxu0 0.0
  %241 = vmatprep.subr.mxu0 0.0
  %242 = vmatpush1.msra.mxu0 0.0
  %243 = vmatprep.subr.mxu0 0.0
  %244 = vmatpush1.msra.mxu0 0.0
  %245 = vmatprep.subr.mxu0 0.0
  %246 = vmatpush1.msra.mxu0 0.0
  %247 = vmatprep.subr.mxu0 0.0
  %248 = vmatpush1.msra.mxu0 0.0
  %249 = vmatprep.subr.mxu0 0.0
  %250 = vmatpush1.msra.mxu0 0.0
  %251 = vmatprep.subr.mxu0 0.0
  %252 = vmatpush1.msra.mxu0 0.0
  %253 = vmatprep.subr.mxu0 0.0
  %254 = vmatpush1.msra.mxu0 0.0
  %255 = vmatprep.subr.mxu0 0.0
  %256 = vmatpush1.msra.mxu0 0.0
  %257 = vmatprep.subr.mxu0 0.0
  %258 = vmatpush1.msra.mxu0 0.0
  %259 = vmatprep.mubr.f32.mxu0 0.0
  %260 = vmatmul.mubr.f32.gmra.mrb[0].mxu0 %v193
  %v261 = vpop.f32.mrb[0].mxu0
  %v262 = vadd.f32 0.0, %v261
  %v263 = vpop.f32.mrb[0].mxu0
  %264 = vdwg.mxu0
  %v265 = vadd.f32 %v190, %v262
  %v266 = vxor.u32 %v265, 2147483648
  %v267 = vmul.f32 %v266, 1.442695
  %v268 = vpow.pop %v267
  %v269 = vadd.f32 %v268, 1.0
  %v270 = vrcp.pop %v269
  %v271 = vmul.f32 1.0, %v270
  %272 = vrot.lane.b32.xlu0 %v189, 64
  %v273 = vpop.permute.xlu0 %272
  %v275 = vadd.f32 %v262, %v273
  %277 = vrot.lane.b32.xlu0 %v275, 64
  %v278 = vpop.permute.xlu0 %277
  %v280 = vmul.f32 %v271, %v278
  %282 = vrot.lane.b32.xlu0 %v280, 64
  %v283 = vpop.permute.xlu0 %282
  %v285 = vadd.f32 %v190, %v283
  %v286 = vtanh.pop %v285
  %v287 = vsub.f32 1.0, %v271
  %289 = vrot.lane.b32.xlu0 %v286, 96
  %v290 = vpop.permute.xlu0 %289
  %v292 = vmul.f32 %v287, %v290
  %v293 = vmul.f32 %v271, 0.0
  %v294 = vadd.f32 %v292, %v293
  %s295 = scalar_lea.vmem [#allocation2], 8
  %v296 = vld [vmem:[%s295] sm:$0xff]
  %298 = vrot.lane.b32.xlu0 %v294, 96
  %v299 = vpop.permute.xlu0 %298
  %v300 = vsel %vm191, %v299, 0
  %302 = vmatprep.subr.mxu0 0.0
  %303 = vmatpush1.msra.mxu0 %v180
  %304 = vmatprep.subr.mxu0 0.0
  %305 = vmatpush1.msra.mxu0 %v181
  %306 = vmatprep.subr.mxu0 0.0
  %307 = vmatpush1.msra.mxu0 %v182
  %308 = vmatprep.subr.mxu0 0.0
  %309 = vmatpush1.msra.mxu0 %v183
  %310 = vmatprep.subr.mxu0 0.0
  %311 = vmatpush1.msra.mxu0 0.0
  %312 = vmatprep.subr.mxu0 0.0
  %313 = vmatpush1.msra.mxu0 0.0
  %314 = vmatprep.subr.mxu0 0.0
  %315 = vmatpush1.msra.mxu0 0.0
  %316 = vmatprep.subr.mxu0 0.0
  %317 = vmatpush1.msra.mxu0 0.0
  %318 = vmatprep.subr.mxu0 0.0
  %319 = vmatpush1.msra.mxu0 0.0
  %320 = vmatprep.subr.mxu0 0.0
  %321 = vmatpush1.msra.mxu0 0.0
  %322 = vmatprep.subr.mxu0 0.0
  %323 = vmatpush1.msra.mxu0 0.0
  %324 = vmatprep.subr.mxu0 0.0
  %325 = vmatpush1.msra.mxu0 0.0
  %326 = vmatprep.subr.mxu0 0.0
  %327 = vmatpush1.msra.mxu0 0.0
  %328 = vmatprep.subr.mxu0 0.0
  %329 = vmatpush1.msra.mxu0 0.0
  %330 = vmatprep.subr.mxu0 0.0
  %331 = vmatpush1.msra.mxu0 0.0
  %332 = vmatprep.subr.mxu0 0.0
  %333 = vmatpush1.msra.mxu0 0.0
  %334 = vmatprep.subr.mxu0 0.0
  %335 = vmatpush1.msra.mxu0 0.0
  %336 = vmatprep.subr.mxu0 0.0
  %337 = vmatpush1.msra.mxu0 0.0
  %338 = vmatprep.subr.mxu0 0.0
  %339 = vmatpush1.msra.mxu0 0.0
  %340 = vmatprep.subr.mxu0 0.0
  %341 = vmatpush1.msra.mxu0 0.0
  %342 = vmatprep.subr.mxu0 0.0
  %343 = vmatpush1.msra.mxu0 0.0
  %344 = vmatprep.subr.mxu0 0.0
  %345 = vmatpush1.msra.mxu0 0.0
  %346 = vmatprep.subr.mxu0 0.0
  %347 = vmatpush1.msra.mxu0 0.0
  %348 = vmatprep.subr.mxu0 0.0
  %349 = vmatpush1.msra.mxu0 0.0
  %350 = vmatprep.subr.mxu0 0.0
  %351 = vmatpush1.msra.mxu0 0.0
  %352 = vmatprep.subr.mxu0 0.0
  %353 = vmatpush1.msra.mxu0 0.0
  %354 = vmatprep.subr.mxu0 0.0
  %355 = vmatpush1.msra.mxu0 0.0
  %356 = vmatprep.subr.mxu0 0.0
  %357 = vmatpush1.msra.mxu0 0.0
  %358 = vmatprep.subr.mxu0 0.0
  %359 = vmatpush1.msra.mxu0 0.0
  %360 = vmatprep.subr.mxu0 0.0
  %361 = vmatpush1.msra.mxu0 0.0
  %362 = vmatprep.subr.mxu0 0.0
  %363 = vmatpush1.msra.mxu0 0.0
  %364 = vmatprep.subr.mxu0 0.0
  %365 = vmatpush1.msra.mxu0 0.0
  %366 = vmatprep.mubr.f32.mxu0 0.0
  %367 = vmatmul.mubr.f32.gmra.mrb[0].mxu0 %v300
  %v368 = vpop.f32.mrb[0].mxu0
  %v369 = vadd.f32 0.0, %v368
  %v370 = vpop.f32.mrb[0].mxu0
  %371 = vdwg.mxu0
  %v372 = vadd.f32 %v296, %v369
  %v373 = vxor.u32 %v372, 2147483648
  %v374 = vmul.f32 %v373, 1.442695
  %v375 = vpow.pop %v374
  %v376 = vadd.f32 %v375, 1.0
  %v377 = vrcp.pop %v376
  %v378 = vmul.f32 1.0, %v377
  %v379 = vadd.f32 %v369, %v273
  %381 = vrot.lane.b32.xlu0 %v379, 64
  %v382 = vpop.permute.xlu0 %381
  %v384 = vmul.f32 %v378, %v382
  %386 = vrot.lane.b32.xlu0 %v384, 64
  %v387 = vpop.permute.xlu0 %386
  %v389 = vadd.f32 %v296, %v387
  %v390 = vtanh.pop %v389
  %v391 = vsub.f32 1.0, %v378
  %393 = vrot.lane.b32.xlu0 %v390, 96
  %v394 = vpop.permute.xlu0 %393
  %v396 = vmul.f32 %v391, %v394
  %v397 = vmul.f32 %v378, %v294
  %v398 = vadd.f32 %v396, %v397
  %s399 = scalar_lea.vmem [#allocation2], 16
  %v400 = vld [vmem:[%s399] sm:$0xff]
  %402 = vrot.lane.b32.xlu0 %v398, 96
  %v403 = vpop.permute.xlu0 %402
  %v404 = vsel %vm191, %v403, 0
  %406 = vmatprep.subr.mxu0 0.0
  %407 = vmatpush1.msra.mxu0 %v180
  %408 = vmatprep.subr.mxu0 0.0
  %409 = vmatpush1.msra.mxu0 %v181
  %410 = vmatprep.subr.mxu0 0.0
  %411 = vmatpush1.msra.mxu0 %v182
  %412 = vmatprep.subr.mxu0 0.0
  %413 = vmatpush1.msra.mxu0 %v183
  %414 = vmatprep.subr.mxu0 0.0
  %415 = vmatpush1.msra.mxu0 0.0
  %416 = vmatprep.subr.mxu0 0.0
  %417 = vmatpush1.msra.mxu0 0.0
  %418 = vmatprep.subr.mxu0 0.0
  %419 = vmatpush1.msra.mxu0 0.0
  %420 = vmatprep.subr.mxu0 0.0
  %421 = vmatpush1.msra.mxu0 0.0
  %422 = vmatprep.subr.mxu0 0.0
  %423 = vmatpush1.msra.mxu0 0.0
  %424 = vmatprep.subr.mxu0 0.0
  %425 = vmatpush1.msra.mxu0 0.0
  %426 = vmatprep.subr.mxu0 0.0
  %427 = vmatpush1.msra.mxu0 0.0
  %428 = vmatprep.subr.mxu0 0.0
  %429 = vmatpush1.msra.mxu0 0.0
  %430 = vmatprep.subr.mxu0 0.0
  %431 = vmatpush1.msra.mxu0 0.0
  %432 = vmatprep.subr.mxu0 0.0
  %433 = vmatpush1.msra.mxu0 0.0
  %434 = vmatprep.subr.mxu0 0.0
  %435 = vmatpush1.msra.mxu0 0.0
  %436 = vmatprep.subr.mxu0 0.0
  %437 = vmatpush1.msra.mxu0 0.0
  %438 = vmatprep.subr.mxu0 0.0
  %439 = vmatpush1.msra.mxu0 0.0
  %440 = vmatprep.subr.mxu0 0.0
  %441 = vmatpush1.msra.mxu0 0.0
  %442 = vmatprep.subr.mxu0 0.0
  %443 = vmatpush1.msra.mxu0 0.0
  %444 = vmatprep.subr.mxu0 0.0
  %445 = vmatpush1.msra.mxu0 0.0
  %446 = vmatprep.subr.mxu0 0.0
  %447 = vmatpush1.msra.mxu0 0.0
  %448 = vmatprep.subr.mxu0 0.0
  %449 = vmatpush1.msra.mxu0 0.0
  %450 = vmatprep.subr.mxu0 0.0
  %451 = vmatpush1.msra.mxu0 0.0
  %452 = vmatprep.subr.mxu0 0.0
  %453 = vmatpush1.msra.mxu0 0.0
  %454 = vmatprep.subr.mxu0 0.0
  %455 = vmatpush1.msra.mxu0 0.0
  %456 = vmatprep.subr.mxu0 0.0
  %457 = vmatpush1.msra.mxu0 0.0
  %458 = vmatprep.subr.mxu0 0.0
  %459 = vmatpush1.msra.mxu0 0.0
  %460 = vmatprep.subr.mxu0 0.0
  %461 = vmatpush1.msra.mxu0 0.0
  %462 = vmatprep.subr.mxu0 0.0
  %463 = vmatpush1.msra.mxu0 0.0
  %464 = vmatprep.subr.mxu0 0.0
  %465 = vmatpush1.msra.mxu0 0.0
  %466 = vmatprep.subr.mxu0 0.0
  %467 = vmatpush1.msra.mxu0 0.0
  %468 = vmatprep.subr.mxu0 0.0
  %469 = vmatpush1.msra.mxu0 0.0
  %470 = vmatprep.mubr.f32.mxu0 0.0
  %471 = vmatmul.mubr.f32.gmra.mrb[0].mxu0 %v404
  %v472 = vpop.f32.mrb[0].mxu0
  %v473 = vadd.f32 0.0, %v472
  %v474 = vpop.f32.mrb[0].mxu0
  %475 = vdwg.mxu0
  %v476 = vadd.f32 %v400, %v473
  %v477 = vxor.u32 %v476, 2147483648
  %v478 = vmul.f32 %v477, 1.442695
  %v479 = vpow.pop %v478
  %v480 = vadd.f32 %v479, 1.0
  %v481 = vrcp.pop %v480
  %v482 = vmul.f32 1.0, %v481
  %v483 = vadd.f32 %v473, %v273
  %485 = vrot.lane.b32.xlu0 %v483, 64
  %v486 = vpop.permute.xlu0 %485
  %v488 = vmul.f32 %v482, %v486
  %490 = vrot.lane.b32.xlu0 %v488, 64
  %v491 = vpop.permute.xlu0 %490
  %v493 = vadd.f32 %v400, %v491
  %v494 = vtanh.pop %v493
  %v495 = vsub.f32 1.0, %v482
  %497 = vrot.lane.b32.xlu0 %v494, 96
  %v498 = vpop.permute.xlu0 %497
  %v500 = vmul.f32 %v495, %v498
  %v501 = vmul.f32 %v482, %v398
  %v502 = vadd.f32 %v500, %v501
  %s503 = scalar_lea.vmem [#allocation2], 24
  %v504 = vld [vmem:[%s503] sm:$0xff]
  %506 = vrot.lane.b32.xlu0 %v502, 96
  %v507 = vpop.permute.xlu0 %506
  %v508 = vsel %vm191, %v507, 0
  %510 = vmatprep.subr.mxu0 0.0
  %511 = vmatpush1.msra.mxu0 %v180
  %512 = vmatprep.subr.mxu0 0.0
  %513 = vmatpush1.msra.mxu0 %v181
  %514 = vmatprep.subr.mxu0 0.0
  %515 = vmatpush1.msra.mxu0 %v182
  %516 = vmatprep.subr.mxu0 0.0
  %517 = vmatpush1.msra.mxu0 %v183
  %518 = vmatprep.subr.mxu0 0.0
  %519 = vmatpush1.msra.mxu0 0.0
  %520 = vmatprep.subr.mxu0 0.0
  %521 = vmatpush1.msra.mxu0 0.0
  %522 = vmatprep.subr.mxu0 0.0
  %523 = vmatpush1.msra.mxu0 0.0
  %524 = vmatprep.subr.mxu0 0.0
  %525 = vmatpush1.msra.mxu0 0.0
  %526 = vmatprep.subr.mxu0 0.0
  %527 = vmatpush1.msra.mxu0 0.0
  %528 = vmatprep.subr.mxu0 0.0
  %529 = vmatpush1.msra.mxu0 0.0
  %530 = vmatprep.subr.mxu0 0.0
  %531 = vmatpush1.msra.mxu0 0.0
  %532 = vmatprep.subr.mxu0 0.0
  %533 = vmatpush1.msra.mxu0 0.0
  %534 = vmatprep.subr.mxu0 0.0
  %535 = vmatpush1.msra.mxu0 0.0
  %536 = vmatprep.subr.mxu0 0.0
  %537 = vmatpush1.msra.mxu0 0.0
  %538 = vmatprep.subr.mxu0 0.0
  %539 = vmatpush1.msra.mxu0 0.0
  %540 = vmatprep.subr.mxu0 0.0
  %541 = vmatpush1.msra.mxu0 0.0
  %542 = vmatprep.subr.mxu0 0.0
  %543 = vmatpush1.msra.mxu0 0.0
  %544 = vmatprep.subr.mxu0 0.0
  %545 = vmatpush1.msra.mxu0 0.0
  %546 = vmatprep.subr.mxu0 0.0
  %547 = vmatpush1.msra.mxu0 0.0
  %548 = vmatprep.subr.mxu0 0.0
  %549 = vmatpush1.msra.mxu0 0.0
  %550 = vmatprep.subr.mxu0 0.0
  %551 = vmatpush1.msra.mxu0 0.0
  %552 = vmatprep.subr.mxu0 0.0
  %553 = vmatpush1.msra.mxu0 0.0
  %554 = vmatprep.subr.mxu0 0.0
  %555 = vmatpush1.msra.mxu0 0.0
  %556 = vmatprep.subr.mxu0 0.0
  %557 = vmatpush1.msra.mxu0 0.0
  %558 = vmatprep.subr.mxu0 0.0
  %559 = vmatpush1.msra.mxu0 0.0
  %560 = vmatprep.subr.mxu0 0.0
  %561 = vmatpush1.msra.mxu0 0.0
  %562 = vmatprep.subr.mxu0 0.0
  %563 = vmatpush1.msra.mxu0 0.0
  %564 = vmatprep.subr.mxu0 0.0
  %565 = vmatpush1.msra.mxu0 0.0
  %566 = vmatprep.subr.mxu0 0.0
  %567 = vmatpush1.msra.mxu0 0.0
  %568 = vmatprep.subr.mxu0 0.0
  %569 = vmatpush1.msra.mxu0 0.0
  %570 = vmatprep.subr.mxu0 0.0
  %571 = vmatpush1.msra.mxu0 0.0
  %572 = vmatprep.subr.mxu0 0.0
  %573 = vmatpush1.msra.mxu0 0.0
  %574 = vmatprep.mubr.f32.mxu0 0.0
  %575 = vmatmul.mubr.f32.gmra.mrb[0].mxu0 %v508
  %v576 = vpop.f32.mrb[0].mxu0
  %v577 = vadd.f32 0.0, %v576
  %v578 = vpop.f32.mrb[0].mxu0
  %579 = vdwg.mxu0
  %v580 = vadd.f32 %v504, %v577
  %v581 = vxor.u32 %v580, 2147483648
  %v582 = vmul.f32 %v581, 1.442695
  %v583 = vpow.pop %v582
  %v584 = vadd.f32 %v583, 1.0
  %v585 = vrcp.pop %v584
  %v586 = vmul.f32 1.0, %v585
  %v587 = vadd.f32 %v577, %v273
  %589 = vrot.lane.b32.xlu0 %v587, 64
  %v590 = vpop.permute.xlu0 %589
  %v592 = vmul.f32 %v586, %v590
  %594 = vrot.lane.b32.xlu0 %v592, 64
  %v595 = vpop.permute.xlu0 %594
  %v597 = vadd.f32 %v504, %v595
  %v598 = vtanh.pop %v597
  %v599 = vsub.f32 1.0, %v586
  %601 = vrot.lane.b32.xlu0 %v598, 96
  %v602 = vpop.permute.xlu0 %601
  %v604 = vmul.f32 %v599, %v602
  %v605 = vmul.f32 %v586, %v502
  %v606 = vadd.f32 %v604, %v605
  %s607 = scalar_lea.vmem [#allocation2], 32
  %v608 = vld [vmem:[%s607] sm:$0xff]
  %610 = vrot.lane.b32.xlu0 %v606, 96
  %v611 = vpop.permute.xlu0 %610
  %v612 = vsel %vm191, %v611, 0
  %614 = vmatprep.subr.mxu0 0.0
  %615 = vmatpush1.msra.mxu0 %v180
  %616 = vmatprep.subr.mxu0 0.0
  %617 = vmatpush1.msra.mxu0 %v181
  %618 = vmatprep.subr.mxu0 0.0
  %619 = vmatpush1.msra.mxu0 %v182
  %620 = vmatprep.subr.mxu0 0.0
  %621 = vmatpush1.msra.mxu0 %v183
  %622 = vmatprep.subr.mxu0 0.0
  %623 = vmatpush1.msra.mxu0 0.0
  %624 = vmatprep.subr.mxu0 0.0
  %625 = vmatpush1.msra.mxu0 0.0
  %626 = vmatprep.subr.mxu0 0.0
  %627 = vmatpush1.msra.mxu0 0.0
  %628 = vmatprep.subr.mxu0 0.0
  %629 = vmatpush1.msra.mxu0 0.0
  %630 = vmatprep.subr.mxu0 0.0
  %631 = vmatpush1.msra.mxu0 0.0
  %632 = vmatprep.subr.mxu0 0.0
  %633 = vmatpush1.msra.mxu0 0.0
  %634 = vmatprep.subr.mxu0 0.0
  %635 = vmatpush1.msra.mxu0 0.0
  %636 = vmatprep.subr.mxu0 0.0
  %637 = vmatpush1.msra.mxu0 0.0
  %638 = vmatprep.subr.mxu0 0.0
  %639 = vmatpush1.msra.mxu0 0.0
  %640 = vmatprep.subr.mxu0 0.0
  %641 = vmatpush1.msra.mxu0 0.0
  %642 = vmatprep.subr.mxu0 0.0
  %643 = vmatpush1.msra.mxu0 0.0
  %644 = vmatprep.subr.mxu0 0.0
  %645 = vmatpush1.msra.mxu0 0.0
  %646 = vmatprep.subr.mxu0 0.0
  %647 = vmatpush1.msra.mxu0 0.0
  %648 = vmatprep.subr.mxu0 0.0
  %649 = vmatpush1.msra.mxu0 0.0
  %650 = vmatprep.subr.mxu0 0.0
  %651 = vmatpush1.msra.mxu0 0.0
  %652 = vmatprep.subr.mxu0 0.0
  %653 = vmatpush1.msra.mxu0 0.0
  %654 = vmatprep.subr.mxu0 0.0
  %655 = vmatpush1.msra.mxu0 0.0
  %656 = vmatprep.subr.mxu0 0.0
  %657 = vmatpush1.msra.mxu0 0.0
  %658 = vmatprep.subr.mxu0 0.0
  %659 = vmatpush1.msra.mxu0 0.0
  %660 = vmatprep.subr.mxu0 0.0
  %661 = vmatpush1.msra.mxu0 0.0
  %662 = vmatprep.subr.mxu0 0.0
  %663 = vmatpush1.msra.mxu0 0.0
  %664 = vmatprep.subr.mxu0 0.0
  %665 = vmatpush1.msra.mxu0 0.0
  %666 = vmatprep.subr.mxu0 0.0
  %667 = vmatpush1.msra.mxu0 0.0
  %668 = vmatprep.subr.mxu0 0.0
  %669 = vmatpush1.msra.mxu0 0.0
  %670 = vmatprep.subr.mxu0 0.0
  %671 = vmatpush1.msra.mxu0 0.0
  %672 = vmatprep.subr.mxu0 0.0
  %673 = vmatpush1.msra.mxu0 0.0
  %674 = vmatprep.subr.mxu0 0.0
  %675 = vmatpush1.msra.mxu0 0.0
  %676 = vmatprep.subr.mxu0 0.0
  %677 = vmatpush1.msra.mxu0 0.0
  %678 = vmatprep.mubr.f32.mxu0 0.0
  %679 = vmatmul.mubr.f32.gmra.mrb[0].mxu0 %v612
  %v680 = vpop.f32.mrb[0].mxu0
  %v681 = vadd.f32 0.0, %v680
  %v682 = vpop.f32.mrb[0].mxu0
  %683 = vdwg.mxu0
  %v684 = vadd.f32 %v608, %v681
  %v685 = vxor.u32 %v684, 2147483648
  %v686 = vmul.f32 %v685, 1.442695
  %v687 = vpow.pop %v686
  %v688 = vadd.f32 %v687, 1.0
  %v689 = vrcp.pop %v688
  %v690 = vmul.f32 1.0, %v689
  %v691 = vadd.f32 %v681, %v273
  %693 = vrot.lane.b32.xlu0 %v691, 64
  %v694 = vpop.permute.xlu0 %693
  %v696 = vmul.f32 %v690, %v694
  %698 = vrot.lane.b32.xlu0 %v696, 64
  %v699 = vpop.permute.xlu0 %698
  %v701 = vadd.f32 %v608, %v699
  %v702 = vtanh.pop %v701
  %v703 = vsub.f32 1.0, %v690
  %705 = vrot.lane.b32.xlu0 %v702, 96
  %v706 = vpop.permute.xlu0 %705
  %v708 = vmul.f32 %v703, %v706
  %v709 = vmul.f32 %v690, %v606
  %v710 = vadd.f32 %v708, %v709
  %s711 = scalar_lea.vmem [#allocation2], 40
  %v712 = vld [vmem:[%s711] sm:$0xff]
  %714 = vrot.lane.b32.xlu0 %v710, 96
  %v715 = vpop.permute.xlu0 %714
  %v716 = vsel %vm191, %v715, 0
  %718 = vmatprep.subr.mxu0 0.0
  %719 = vmatpush1.msra.mxu0 %v180
  %720 = vmatprep.subr.mxu0 0.0
  %721 = vmatpush1.msra.mxu0 %v181
  %722 = vmatprep.subr.mxu0 0.0
  %723 = vmatpush1.msra.mxu0 %v182
  %724 = vmatprep.subr.mxu0 0.0
  %725 = vmatpush1.msra.mxu0 %v183
  %726 = vmatprep.subr.mxu0 0.0
  %727 = vmatpush1.msra.mxu0 0.0
  %728 = vmatprep.subr.mxu0 0.0
  %729 = vmatpush1.msra.mxu0 0.0
  %730 = vmatprep.subr.mxu0 0.0
  %731 = vmatpush1.msra.mxu0 0.0
  %732 = vmatprep.subr.mxu0 0.0
  %733 = vmatpush1.msra.mxu0 0.0
  %734 = vmatprep.subr.mxu0 0.0
  %735 = vmatpush1.msra.mxu0 0.0
  %736 = vmatprep.subr.mxu0 0.0
  %737 = vmatpush1.msra.mxu0 0.0
  %738 = vmatprep.subr.mxu0 0.0
  %739 = vmatpush1.msra.mxu0 0.0
  %740 = vmatprep.subr.mxu0 0.0
  %741 = vmatpush1.msra.mxu0 0.0
  %742 = vmatprep.subr.mxu0 0.0
  %743 = vmatpush1.msra.mxu0 0.0
  %744 = vmatprep.subr.mxu0 0.0
  %745 = vmatpush1.msra.mxu0 0.0
  %746 = vmatprep.subr.mxu0 0.0
  %747 = vmatpush1.msra.mxu0 0.0
  %748 = vmatprep.subr.mxu0 0.0
  %749 = vmatpush1.msra.mxu0 0.0
  %750 = vmatprep.subr.mxu0 0.0
  %751 = vmatpush1.msra.mxu0 0.0
  %752 = vmatprep.subr.mxu0 0.0
  %753 = vmatpush1.msra.mxu0 0.0
  %754 = vmatprep.subr.mxu0 0.0
  %755 = vmatpush1.msra.mxu0 0.0
  %756 = vmatprep.subr.mxu0 0.0
  %757 = vmatpush1.msra.mxu0 0.0
  %758 = vmatprep.subr.mxu0 0.0
  %759 = vmatpush1.msra.mxu0 0.0
  %760 = vmatprep.subr.mxu0 0.0
  %761 = vmatpush1.msra.mxu0 0.0
  %762 = vmatprep.subr.mxu0 0.0
  %763 = vmatpush1.msra.mxu0 0.0
  %764 = vmatprep.subr.mxu0 0.0
  %765 = vmatpush1.msra.mxu0 0.0
  %766 = vmatprep.subr.mxu0 0.0
  %767 = vmatpush1.msra.mxu0 0.0
  %768 = vmatprep.subr.mxu0 0.0
  %769 = vmatpush1.msra.mxu0 0.0
  %770 = vmatprep.subr.mxu0 0.0
  %771 = vmatpush1.msra.mxu0 0.0
  %772 = vmatprep.subr.mxu0 0.0
  %773 = vmatpush1.msra.mxu0 0.0
  %774 = vmatprep.subr.mxu0 0.0
  %775 = vmatpush1.msra.mxu0 0.0
  %776 = vmatprep.subr.mxu0 0.0
  %777 = vmatpush1.msra.mxu0 0.0
  %778 = vmatprep.subr.mxu0 0.0
  %779 = vmatpush1.msra.mxu0 0.0
  %780 = vmatprep.subr.mxu0 0.0
  %781 = vmatpush1.msra.mxu0 0.0
  %782 = vmatprep.mubr.f32.mxu0 0.0
  %783 = vmatmul.mubr.f32.gmra.mrb[0].mxu0 %v716
  %v784 = vpop.f32.mrb[0].mxu0
  %v785 = vadd.f32 0.0, %v784
  %v786 = vpop.f32.mrb[0].mxu0
  %787 = vdwg.mxu0
  %v788 = vadd.f32 %v712, %v785
  %v789 = vxor.u32 %v788, 2147483648
  %v790 = vmul.f32 %v789, 1.442695
  %v791 = vpow.pop %v790
  %v792 = vadd.f32 %v791, 1.0
  %v793 = vrcp.pop %v792
  %v794 = vmul.f32 1.0, %v793
  %v795 = vadd.f32 %v785, %v273
  %797 = vrot.lane.b32.xlu0 %v795, 64
  %v798 = vpop.permute.xlu0 %797
  %v800 = vmul.f32 %v794, %v798
  %802 = vrot.lane.b32.xlu0 %v800, 64
  %v803 = vpop.permute.xlu0 %802
  %v805 = vadd.f32 %v712, %v803
  %v806 = vtanh.pop %v805
  %v807 = vsub.f32 1.0, %v794
  %809 = vrot.lane.b32.xlu0 %v806, 96
  %v810 = vpop.permute.xlu0 %809
  %v812 = vmul.f32 %v807, %v810
  %v813 = vmul.f32 %v794, %v710
  %v814 = vadd.f32 %v812, %v813
  %s815 = scalar_lea.vmem [#allocation2], 48
  %v816 = vld [vmem:[%s815] sm:$0xff]
  %818 = vrot.lane.b32.xlu0 %v814, 96
  %v819 = vpop.permute.xlu0 %818
  %v820 = vsel %vm191, %v819, 0
  %822 = vmatprep.subr.mxu0 0.0
  %823 = vmatpush1.msra.mxu0 %v180
  %824 = vmatprep.subr.mxu0 0.0
  %825 = vmatpush1.msra.mxu0 %v181
  %826 = vmatprep.subr.mxu0 0.0
  %827 = vmatpush1.msra.mxu0 %v182
  %828 = vmatprep.subr.mxu0 0.0
  %829 = vmatpush1.msra.mxu0 %v183
  %830 = vmatprep.subr.mxu0 0.0
  %831 = vmatpush1.msra.mxu0 0.0
  %832 = vmatprep.subr.mxu0 0.0
  %833 = vmatpush1.msra.mxu0 0.0
  %834 = vmatprep.subr.mxu0 0.0
  %835 = vmatpush1.msra.mxu0 0.0
  %836 = vmatprep.subr.mxu0 0.0
  %837 = vmatpush1.msra.mxu0 0.0
  %838 = vmatprep.subr.mxu0 0.0
  %839 = vmatpush1.msra.mxu0 0.0
  %840 = vmatprep.subr.mxu0 0.0
  %841 = vmatpush1.msra.mxu0 0.0
  %842 = vmatprep.subr.mxu0 0.0
  %843 = vmatpush1.msra.mxu0 0.0
  %844 = vmatprep.subr.mxu0 0.0
  %845 = vmatpush1.msra.mxu0 0.0
  %846 = vmatprep.subr.mxu0 0.0
  %847 = vmatpush1.msra.mxu0 0.0
  %848 = vmatprep.subr.mxu0 0.0
  %849 = vmatpush1.msra.mxu0 0.0
  %850 = vmatprep.subr.mxu0 0.0
  %851 = vmatpush1.msra.mxu0 0.0
  %852 = vmatprep.subr.mxu0 0.0
  %853 = vmatpush1.msra.mxu0 0.0
  %854 = vmatprep.subr.mxu0 0.0
  %855 = vmatpush1.msra.mxu0 0.0
  %856 = vmatprep.subr.mxu0 0.0
  %857 = vmatpush1.msra.mxu0 0.0
  %858 = vmatprep.subr.mxu0 0.0
  %859 = vmatpush1.msra.mxu0 0.0
  %860 = vmatprep.subr.mxu0 0.0
  %861 = vmatpush1.msra.mxu0 0.0
  %862 = vmatprep.subr.mxu0 0.0
  %863 = vmatpush1.msra.mxu0 0.0
  %864 = vmatprep.subr.mxu0 0.0
  %865 = vmatpush1.msra.mxu0 0.0
  %866 = vmatprep.subr.mxu0 0.0
  %867 = vmatpush1.msra.mxu0 0.0
  %868 = vmatprep.subr.mxu0 0.0
  %869 = vmatpush1.msra.mxu0 0.0
  %870 = vmatprep.subr.mxu0 0.0
  %871 = vmatpush1.msra.mxu0 0.0
  %872 = vmatprep.subr.mxu0 0.0
  %873 = vmatpush1.msra.mxu0 0.0
  %874 = vmatprep.subr.mxu0 0.0
  %875 = vmatpush1.msra.mxu0 0.0
  %876 = vmatprep.subr.mxu0 0.0
  %877 = vmatpush1.msra.mxu0 0.0
  %878 = vmatprep.subr.mxu0 0.0
  %879 = vmatpush1.msra.mxu0 0.0
  %880 = vmatprep.subr.mxu0 0.0
  %881 = vmatpush1.msra.mxu0 0.0
  %882 = vmatprep.subr.mxu0 0.0
  %883 = vmatpush1.msra.mxu0 0.0
  %884 = vmatprep.subr.mxu0 0.0
  %885 = vmatpush1.msra.mxu0 0.0
  %886 = vmatprep.mubr.f32.mxu0 0.0
  %887 = vmatmul.mubr.f32.gmra.mrb[0].mxu0 %v820
  %v888 = vpop.f32.mrb[0].mxu0
  %v889 = vadd.f32 0.0, %v888
  %v890 = vpop.f32.mrb[0].mxu0
  %891 = vdwg.mxu0
  %v892 = vadd.f32 %v816, %v889
  %v893 = vxor.u32 %v892, 2147483648
  %v894 = vmul.f32 %v893, 1.442695
  %v895 = vpow.pop %v894
  %v896 = vadd.f32 %v895, 1.0
  %v897 = vrcp.pop %v896
  %v898 = vmul.f32 1.0, %v897
  %v899 = vadd.f32 %v889, %v273
  %901 = vrot.lane.b32.xlu0 %v899, 64
  %v902 = vpop.permute.xlu0 %901
  %v904 = vmul.f32 %v898, %v902
  %906 = vrot.lane.b32.xlu0 %v904, 64
  %v907 = vpop.permute.xlu0 %906
  %v909 = vadd.f32 %v816, %v907
  %v910 = vtanh.pop %v909
  %v911 = vsub.f32 1.0, %v898
  %913 = vrot.lane.b32.xlu0 %v910, 96
  %v914 = vpop.permute.xlu0 %913
  %v916 = vmul.f32 %v911, %v914
  %v917 = vmul.f32 %v898, %v814
  %v918 = vadd.f32 %v916, %v917
  %s919 = scalar_lea.vmem [#allocation2], 56
  %v920 = vld [vmem:[%s919] sm:$0xff]
  %922 = vrot.lane.b32.xlu0 %v918, 96
  %v923 = vpop.permute.xlu0 %922
  %v924 = vsel %vm191, %v923, 0
  %926 = vmatprep.subr.mxu0 0.0
  %927 = vmatpush1.msra.mxu0 %v180
  %928 = vmatprep.subr.mxu0 0.0
  %929 = vmatpush1.msra.mxu0 %v181
  %930 = vmatprep.subr.mxu0 0.0
  %931 = vmatpush1.msra.mxu0 %v182
  %932 = vmatprep.subr.mxu0 0.0
  %933 = vmatpush1.msra.mxu0 %v183
  %934 = vmatprep.subr.mxu0 0.0
  %935 = vmatpush1.msra.mxu0 0.0
  %936 = vmatprep.subr.mxu0 0.0
  %937 = vmatpush1.msra.mxu0 0.0
  %938 = vmatprep.subr.mxu0 0.0
  %939 = vmatpush1.msra.mxu0 0.0
  %940 = vmatprep.subr.mxu0 0.0
  %941 = vmatpush1.msra.mxu0 0.0
  %942 = vmatprep.subr.mxu0 0.0
  %943 = vmatpush1.msra.mxu0 0.0
  %944 = vmatprep.subr.mxu0 0.0
  %945 = vmatpush1.msra.mxu0 0.0
  %946 = vmatprep.subr.mxu0 0.0
  %947 = vmatpush1.msra.mxu0 0.0
  %948 = vmatprep.subr.mxu0 0.0
  %949 = vmatpush1.msra.mxu0 0.0
  %950 = vmatprep.subr.mxu0 0.0
  %951 = vmatpush1.msra.mxu0 0.0
  %952 = vmatprep.subr.mxu0 0.0
  %953 = vmatpush1.msra.mxu0 0.0
  %954 = vmatprep.subr.mxu0 0.0
  %955 = vmatpush1.msra.mxu0 0.0
  %956 = vmatprep.subr.mxu0 0.0
  %957 = vmatpush1.msra.mxu0 0.0
  %958 = vmatprep.subr.mxu0 0.0
  %959 = vmatpush1.msra.mxu0 0.0
  %960 = vmatprep.subr.mxu0 0.0
  %961 = vmatpush1.msra.mxu0 0.0
  %962 = vmatprep.subr.mxu0 0.0
  %963 = vmatpush1.msra.mxu0 0.0
  %964 = vmatprep.subr.mxu0 0.0
  %965 = vmatpush1.msra.mxu0 0.0
  %966 = vmatprep.subr.mxu0 0.0
  %967 = vmatpush1.msra.mxu0 0.0
  %968 = vmatprep.subr.mxu0 0.0
  %969 = vmatpush1.msra.mxu0 0.0
  %970 = vmatprep.subr.mxu0 0.0
  %971 = vmatpush1.msra.mxu0 0.0
  %972 = vmatprep.subr.mxu0 0.0
  %973 = vmatpush1.msra.mxu0 0.0
  %974 = vmatprep.subr.mxu0 0.0
  %975 = vmatpush1.msra.mxu0 0.0
  %976 = vmatprep.subr.mxu0 0.0
  %977 = vmatpush1.msra.mxu0 0.0
  %978 = vmatprep.subr.mxu0 0.0
  %979 = vmatpush1.msra.mxu0 0.0
  %980 = vmatprep.subr.mxu0 0.0
  %981 = vmatpush1.msra.mxu0 0.0
  %982 = vmatprep.subr.mxu0 0.0
  %983 = vmatpush1.msra.mxu0 0.0
  %984 = vmatprep.subr.mxu0 0.0
  %985 = vmatpush1.msra.mxu0 0.0
  %986 = vmatprep.subr.mxu0 0.0
  %987 = vmatpush1.msra.mxu0 0.0
  %988 = vmatprep.subr.mxu0 0.0
  %989 = vmatpush1.msra.mxu0 0.0
  %990 = vmatprep.mubr.f32.mxu0 0.0
  %991 = vmatmul.mubr.f32.gmra.mrb[0].mxu0 %v924
  %v992 = vpop.f32.mrb[0].mxu0
  %v993 = vadd.f32 0.0, %v992
  %v994 = vpop.f32.mrb[0].mxu0
  %995 = vdwg.mxu0
  %v996 = vadd.f32 %v920, %v993
  %v997 = vxor.u32 %v996, 2147483648
  %v998 = vmul.f32 %v997, 1.442695
  %v999 = vpow.pop %v998
  %v1000 = vadd.f32 %v999, 1.0
  %v1001 = vrcp.pop %v1000
  %v1002 = vmul.f32 1.0, %v1001
  %v1003 = vadd.f32 %v993, %v273
  %1005 = vrot.lane.b32.xlu0 %v1003, 64
  %v1006 = vpop.permute.xlu0 %1005
  %v1008 = vmul.f32 %v1002, %v1006
  %1010 = vrot.lane.b32.xlu0 %v1008, 64
  %v1011 = vpop.permute.xlu0 %1010
  %v1013 = vadd.f32 %v920, %v1011
  %v1014 = vtanh.pop %v1013
  %v1015 = vsub.f32 1.0, %v1002
  %1017 = vrot.lane.b32.xlu0 %v1014, 96
  %v1018 = vpop.permute.xlu0 %1017
  %v1020 = vmul.f32 %v1015, %v1018
  %v1021 = vmul.f32 %v1002, %v918
  %v1022 = vadd.f32 %v1020, %v1021
  %v1023 = vld [vmem:[%s5] sm:$0xff]
  %v1024 = vld [vmem:[%s5 + $0x8] sm:$0xff]
  %v1025 = vld [vmem:[%s5 + $0x10] sm:$0xff]
  %v1026 = vld [vmem:[%s5 + $0x18] sm:$0xff]
  %v1027 = vld [vmem:[%s6] sm:$0x1]
  %v1029 = vlaneseq
  %v1030 = vshrl.u32 %v1029, 7
  %v1031 = vsub.s32 0, %v1030
  %v1032 = vrot.slane %v1027, %v1031
  %1035 = vrot.lane.b32.xlu0 %v1022, 96
  %v1036 = vpop.permute.xlu0 %1035
  %v1037 = vsel %vm191, %v1036, 0
  %1039 = vmatprep.subr.mxu0 0.0
  %1040 = vmatpush1.msra.mxu0 %v1023
  %1041 = vmatprep.subr.mxu0 0.0
  %1042 = vmatpush1.msra.mxu0 %v1024
  %1043 = vmatprep.subr.mxu0 0.0
  %1044 = vmatpush1.msra.mxu0 %v1025
  %1045 = vmatprep.subr.mxu0 0.0
  %1046 = vmatpush1.msra.mxu0 %v1026
  %1047 = vmatprep.subr.mxu0 0.0
  %1048 = vmatpush1.msra.mxu0 0.0
  %1049 = vmatprep.subr.mxu0 0.0
  %1050 = vmatpush1.msra.mxu0 0.0
  %1051 = vmatprep.subr.mxu0 0.0
  %1052 = vmatpush1.msra.mxu0 0.0
  %1053 = vmatprep.subr.mxu0 0.0
  %1054 = vmatpush1.msra.mxu0 0.0
  %1055 = vmatprep.subr.mxu0 0.0
  %1056 = vmatpush1.msra.mxu0 0.0
  %1057 = vmatprep.subr.mxu0 0.0
  %1058 = vmatpush1.msra.mxu0 0.0
  %1059 = vmatprep.subr.mxu0 0.0
  %1060 = vmatpush1.msra.mxu0 0.0
  %1061 = vmatprep.subr.mxu0 0.0
  %1062 = vmatpush1.msra.mxu0 0.0
  %1063 = vmatprep.subr.mxu0 0.0
  %1064 = vmatpush1.msra.mxu0 0.0
  %1065 = vmatprep.subr.mxu0 0.0
  %1066 = vmatpush1.msra.mxu0 0.0
  %1067 = vmatprep.subr.mxu0 0.0
  %1068 = vmatpush1.msra.mxu0 0.0
  %1069 = vmatprep.subr.mxu0 0.0
  %1070 = vmatpush1.msra.mxu0 0.0
  %1071 = vmatprep.subr.mxu0 0.0
  %1072 = vmatpush1.msra.mxu0 0.0
  %1073 = vmatprep.subr.mxu0 0.0
  %1074 = vmatpush1.msra.mxu0 0.0
  %1075 = vmatprep.subr.mxu0 0.0
  %1076 = vmatpush1.msra.mxu0 0.0
  %1077 = vmatprep.subr.mxu0 0.0
  %1078 = vmatpush1.msra.mxu0 0.0
  %1079 = vmatprep.subr.mxu0 0.0
  %1080 = vmatpush1.msra.mxu0 0.0
  %1081 = vmatprep.subr.mxu0 0.0
  %1082 = vmatpush1.msra.mxu0 0.0
  %1083 = vmatprep.subr.mxu0 0.0
  %1084 = vmatpush1.msra.mxu0 0.0
  %1085 = vmatprep.subr.mxu0 0.0
  %1086 = vmatpush1.msra.mxu0 0.0
  %1087 = vmatprep.subr.mxu0 0.0
  %1088 = vmatpush1.msra.mxu0 0.0
  %1089 = vmatprep.subr.mxu0 0.0
  %1090 = vmatpush1.msra.mxu0 0.0
  %1091 = vmatprep.subr.mxu0 0.0
  %1092 = vmatpush1.msra.mxu0 0.0
  %1093 = vmatprep.subr.mxu0 0.0
  %1094 = vmatpush1.msra.mxu0 0.0
  %1095 = vmatprep.subr.mxu0 0.0
  %1096 = vmatpush1.msra.mxu0 0.0
  %1097 = vmatprep.subr.mxu0 0.0
  %1098 = vmatpush1.msra.mxu0 0.0
  %1099 = vmatprep.subr.mxu0 0.0
  %1100 = vmatpush1.msra.mxu0 0.0
  %1101 = vmatprep.subr.mxu0 0.0
  %1102 = vmatpush1.msra.mxu0 0.0
  %1103 = vmatprep.mubr.f32.mxu0 0.0
  %1104 = vmatmul.mubr.f32.gmra.mrb[0].mxu0 %v1037
  %v1105 = vpop.f32.mrb[0].mxu0
  %v1106 = vadd.f32 %v1032, %v1105
  %v1107 = vpop.f32.mrb[0].mxu0
  %1108 = vdwg.mxu0
  %vm1109 = vcmask 130048
  %1110 = vst.msk [vmem:[%s7] sm:$0xff] %vm1109, %v1106
  // Predicated region
  $region30: #{model_forward.1} parent=0 // pred_check
    _
  $region31: #{model_forward.1} parent=0 // pred_check_branch
    %1112 = sbr.rel (0) target = $region33
  $region32: #{model_forward.1} parent=0 // pred_region
    _
  $region33: #{model_forward.1} parent=0 // pred_fallthru
    _
  // Predicated region
  $region34: #{model_forward.1} parent=0 // pred_check
    _
  $region35: #{model_forward.1} parent=0 // pred_check_branch
    %1114 = sbr.rel (0) target = $region37
  $region36: #{model_forward.1} parent=0 // pred_region
    _
  $region37: #{model_forward.1} parent=0 // pred_fallthru
    _

</llo_original>
